<compile_context>
chip_gen: v6e
topology: v6e:2x2x1
jax: 0.10.0
libtpu: 0.0.40
codegen_flags: <defaults>
</compile_context>

<pallas_src>
import functools

import jax
import jax.numpy as jnp
from jax import lax
from jax.experimental import pallas as pl
from jax.experimental.pallas import tpu as pltpu

BN_EPS = 1e-5


# ----------------------------- per-generation sizing ----------------------------------
def _vmem_limit_bytes():
    """Scoped-VMEM limit: ~3/4 of physical, capped at 100 MiB.
    -> ~48 MiB on v7x (64 MiB physical), 96-100 MiB on v5e/v6e (128 MiB)."""
    try:
        cap = pltpu.get_tpu_info().vmem_capacity_bytes
    except Exception:  # pragma: no cover - conservative (v7x-safe) fallback
        cap = 64 * 1024 * 1024
    return int(min(cap * 3 // 4, 100 * 1024 * 1024))


def _pick_row_tile(n_imgs, ho, wo, cin, c1, cout, vmem_budget):
    """Largest tr dividing ho such that the per-tile footprint (double-buffered IO of
    both kernels + in-kernel temporaries) fits vmem_budget and tr*wo stays <= ~8k."""
    bytes_per_row = wo * (
        # kernel 1: bf16 x window / d / h (each 2x double-buffered)
        2 * 2 * (4 * cin) + 2 * 2 * cin + 2 * 2 * c1
        # kernel 1 temporaries: f32 window + dt, bf16 im2col, f32 acc
        + 4 * (4 * cin) + 4 * cin + 2 * 9 * cin + 4 * c1
        # kernel 2: bf16 h window + d input (2x dbuf), f32 output (2x dbuf)
        + 2 * 2 * c1 + 2 * 2 * cin + 4 * 2 * cout
        # kernel 2 temporaries: bf16 im2col + f32 acc
        + 2 * 9 * c1 + 4 * cout)
    max_rows = max(vmem_budget // max(bytes_per_row, 1), 1)
    max_rows = min(max_rows, max(8192 // max(wo, 1), 1))   # keep tr*wo in the 2k-8k range
    if n_imgs == 1:                                         # >= 2 grid steps for v7x's 2 TCs
        max_rows = min(max_rows, max(ho // 2, 1))
    best = 1
    for tr in range(1, ho + 1):
        if ho % tr == 0 and tr <= max_rows:
            best = tr
    return best


# --------------- Kernel 1: downsample + conv1 + ReLU + BN partial stats ---------------
def _ds_conv1_kernel(xm_ref, xt_ref, xb_ref, wd_ref, w1_ref,
                     d_ref, h_ref, s_ref, ss_ref, *, cin):
    # xm: [1, tr, Wo, 4*Cin] bf16 space-to-depth tile; xt/xb: [1, 1, Wo, 4*Cin] halo rows
    # (row index clamped at the image boundary by the index_map -> zeroed here).
    # wd: [4, 1, Cin] f32 depthwise 2x2 taps; w1: [9*Cin, C1] bf16.
    t = pl.program_id(1)
    nt = pl.num_programs(1)

    xm = xm_ref[0].astype(jnp.float32)                      # (tr, wo, 4cin)
    xt = xt_ref[0].astype(jnp.float32)                      # (1, wo, 4cin)
    xb = xb_ref[0].astype(jnp.float32)
    # rows outside the image are conv1's zero padding (in downsampled space)
    xt = jnp.where(t == 0, jnp.zeros_like(xt), xt)
    xb = jnp.where(t == nt - 1, jnp.zeros_like(xb), xb)
    xw = jnp.concatenate([xt, xm, xb], axis=0)              # (tr+2, wo, 4cin)
    tr, wo = xm.shape[0], xm.shape[1]

    # fused depthwise 2x2 / stride-2 downsample: lane-wise weighted sum of the 4
    # space-to-depth channel groups (f32 VPU -> portable to v5e, which lacks bf16 VPU)
    wd = wd_ref[...]
    dt = (xw[:, :, 0 * cin:1 * cin] * wd[0]
          + xw[:, :, 1 * cin:2 * cin] * wd[1]
          + xw[:, :, 2 * cin:3 * cin] * wd[2]
          + xw[:, :, 3 * cin:4 * cin] * wd[3])              # (tr+2, wo, cin)
    d_ref[0] = dt[1:tr + 1].astype(jnp.bfloat16)            # interior rows -> shortcut input

    # conv1 3x3 'same' as ONE im2col-in-VMEM matmul (K = 9*Cin).  The three column
    # shifts are built once (explicit zero columns = conv zero padding) and reused
    # for all three row taps (row shifts are just different row ranges).
    dtb = dt.astype(jnp.bfloat16)
    zcol = jnp.zeros((tr + 2, 1, cin), jnp.bfloat16)
    left = jnp.concatenate([zcol, dtb[:, :wo - 1]], axis=1)     # tap column j-1
    right = jnp.concatenate([dtb[:, 1:], zcol], axis=1)         # tap column j+1
    cols = jnp.concatenate([left, dtb, right], axis=-1)         # (tr+2, wo, 3cin)
    patches = jnp.concatenate([cols[0:tr], cols[1:tr + 1], cols[2:tr + 2]],
                              axis=-1)                          # (tr, wo, 9cin), k-major
    acc = jnp.dot(patches.reshape(tr * wo, 9 * cin), w1_ref[...],
                  preferred_element_type=jnp.float32)
    h = jnp.maximum(acc, 0.0)                                   # ReLU ('cr' of 'crb')
    h_ref[0] = h.reshape(tr, wo, -1).astype(jnp.bfloat16)

    # per-tile BatchNorm partial statistics, computed from the f32 values in-register
    # (finalized across tiles in XLA glue)
    s_ref[...] = jnp.sum(h, axis=0, keepdims=True).reshape(1, 1, 1, -1)
    ss_ref[...] = jnp.sum(h * h, axis=0, keepdims=True).reshape(1, 1, 1, -1)


# ----------- Kernel 2: BN apply + conv2 + fused 1x1 shortcut + residual ReLU ----------
def _bn_conv2_kernel(hm_ref, ht_ref, hb_ref, d_ref, sos_ref, w2_ref, wsc_ref, o_ref):
    # hm: [1, tr, Wo, C1] bf16 pre-BN conv1 activations; ht/hb: [1, 1, Wo, C1] halo rows.
    # d: [1, tr, Wo, Cin] bf16; sos: [1, 1, C1] = shift/scale (BN scale is folded into w2);
    # w2: [9*C1, Cout] bf16 (scale-folded); wsc: [Cin, Cout] bf16.
    t = pl.program_id(1)
    nt = pl.num_programs(1)
    tr, wo, c1 = hm_ref.shape[1], hm_ref.shape[2], hm_ref.shape[3]
    sos = sos_ref[...]                                          # (1, 1, c1) f32

    # BN apply reduced to a single add (scale folded into w2); conv2's zero padding
    # must stay zero post-BN, so only the two boundary halo rows are zeroed (cheap
    # [1, Wo, C1] selects instead of a full-tile iota mask).
    zm = (hm_ref[0].astype(jnp.float32) + sos).astype(jnp.bfloat16)
    zt = ht_ref[0].astype(jnp.float32) + sos
    zb = hb_ref[0].astype(jnp.float32) + sos
    zt = jnp.where(t == 0, jnp.zeros_like(zt), zt).astype(jnp.bfloat16)
    zb = jnp.where(t == nt - 1, jnp.zeros_like(zb), zb).astype(jnp.bfloat16)
    z = jnp.concatenate([zt, zm, zb], axis=0)                   # (tr+2, wo, c1)

    zcol = jnp.zeros((tr + 2, 1, c1), jnp.bfloat16)
    left = jnp.concatenate([zcol, z[:, :wo - 1]], axis=1)
    right = jnp.concatenate([z[:, 1:], zcol], axis=1)
    cols = jnp.concatenate([left, z, right], axis=-1)           # (tr+2, wo, 3c1)
    patches = jnp.concatenate([cols[0:tr], cols[1:tr + 1], cols[2:tr + 2]], axis=-1)

    # 1x1 shortcut fused as the accumulator's initial value (single f32 acc),
    # then conv2 as one im2col matmul (K = 9*C1)
    acc = jnp.dot(d_ref[0].reshape(tr * wo, -1), wsc_ref[...],
                  preferred_element_type=jnp.float32)
    acc = acc + jnp.dot(patches.reshape(tr * wo, 9 * c1), w2_ref[...],
                        preferred_element_type=jnp.float32)
    o_ref[0] = jnp.maximum(acc, 0.0).reshape(tr, wo, -1)        # residual add + ReLU


# ------------------------------------ parameters --------------------------------------
def init_params(key, in_channels, out_channels):
    c1 = max(out_channels, in_channels)             # ResBottle encoder: conv1 widens if needed
    ks = jax.random.split(key, 4)
    wd = 0.1 * jax.random.normal(ks[0], (4, 1, in_channels), jnp.float32)           # dw 2x2
    w1 = 0.1 * jax.random.normal(ks[1], (9, in_channels, c1), jnp.float32)          # conv1 3x3
    w2 = 0.1 * jax.random.normal(ks[2], (9, c1, out_channels), jnp.float32)         # conv2 3x3
    wsc = 0.1 * jax.random.normal(ks[3], (in_channels, out_channels), jnp.float32)  # 1x1 sc
    return dict(
        wd=wd,                                      # f32: VPU path (v5e has no bf16 VPU)
        w1=w1.astype(jnp.bfloat16),                 # bf16: MXU operands
        w2=w2.astype(jnp.bfloat16),
        wsc=wsc.astype(jnp.bfloat16),
        gamma=jnp.ones((c1,), jnp.float32),         # BatchNorm2d default affine
        beta=jnp.zeros((c1,), jnp.float32),
    )


# ------------------------------------- forward ----------------------------------------
@functools.partial(jax.jit, static_argnames=("tile_rows",))
def encoder_forward(x_nchw, params, *, tile_rows=None):
    n, cin, h, w = x_nchw.shape
    assert h % 2 == 0 and w % 2 == 0, "stride-2 downsample needs even spatial dims"
    ho, wo = h // 2, w // 2
    c1 = params["w1"].shape[-1]
    cout = params["w2"].shape[-1]
    m = n * ho * wo

    vmem_limit = _vmem_limit_bytes()
    tr = tile_rows if tile_rows is not None else _pick_row_tile(
        n, ho, wo, cin, c1, cout, vmem_limit // 2)
    assert ho % tr == 0, "row tile must divide the downsampled height"
    nt = ho // tr

    # One fused XLA pass over x: NCHW->NHWC, space-to-depth (so the 2x2/stride-2
    # depthwise downsample becomes a lane-wise weighted sum in-kernel) and bf16 cast
    # (halves kernel 1's dominant HBM read).  pool_scale == 1.0 on this path.
    x = jnp.transpose(x_nchw, (0, 2, 3, 1)).astype(jnp.float32)
    xr = (x.reshape(n, ho, 2, wo, 2, cin)
           .transpose(0, 1, 3, 2, 4, 5)
           .reshape(n, ho, wo, 4 * cin)).astype(jnp.bfloat16)

    w1r = params["w1"].reshape(9 * cin, c1)         # matches im2col ordering (k-major, c-minor)

    cparams = pltpu.CompilerParams(dimension_semantics=("parallel", "parallel"),
                                   vmem_limit_bytes=vmem_limit)

    # Halo rows are fetched straight from HBM through extra 1-row BlockSpecs on the
    # SAME array (no window materialization).  Out-of-image rows are clamped here and
    # zeroed in-kernel (they correspond to the convs' zero padding).
    def main_map(ni, ti):
        return (ni, ti, 0, 0)

    def top_map(ni, ti):
        return (ni, jnp.maximum(ti * tr - 1, 0), 0, 0)

    def bot_map(ni, ti):
        return (ni, jnp.minimum(ti * tr + tr, ho - 1), 0, 0)

    # ---- kernel 1: downsample + conv1 + ReLU + BN partial stats ----
    flops1 = 2 * m * 9 * cin * c1 + 8 * m * cin
    bytes1 = 2 * (xr.size + m * (cin + c1) + w1r.size) + 4 * (2 * n * nt * c1)
    d_out, h_out, s_out, ss_out = pl.pallas_call(
        functools.partial(_ds_conv1_kernel, cin=cin),
        grid=(n, nt),
        in_specs=[
            pl.BlockSpec((1, tr, wo, 4 * cin), main_map),
            pl.BlockSpec((1, 1, wo, 4 * cin), top_map),
            pl.BlockSpec((1, 1, wo, 4 * cin), bot_map),
            pl.BlockSpec((4, 1, cin), lambda ni, ti: (0, 0, 0)),
            pl.BlockSpec((9 * cin, c1), lambda ni, ti: (0, 0)),
        ],
        out_specs=[
            pl.BlockSpec((1, tr, wo, cin), main_map),
            pl.BlockSpec((1, tr, wo, c1), main_map),
            pl.BlockSpec((1, 1, 1, c1), lambda ni, ti: (ni, ti, 0, 0)),
            pl.BlockSpec((1, 1, 1, c1), lambda ni, ti: (ni, ti, 0, 0)),
        ],
        out_shape=[
            jax.ShapeDtypeStruct((n, ho, wo, cin), jnp.bfloat16),   # d (shortcut input)
            jax.ShapeDtypeStruct((n, ho, wo, c1), jnp.bfloat16),    # pre-BN conv1 activations
            jax.ShapeDtypeStruct((n, nt, 1, c1), jnp.float32),      # per-tile sum
            jax.ShapeDtypeStruct((n, nt, 1, c1), jnp.float32),      # per-tile sum of squares
        ],
        compiler_params=cparams,
        cost_estimate=pl.CostEstimate(flops=flops1, transcendentals=0,
                                      bytes_accessed=int(bytes1)),
    )(xr, xr, xr, params["wd"], w1r)

    # ---- finalize BatchNorm2d training-mode stats across tiles (tiny XLA glue) and
    # fold the BN scale into conv2's weights (gamma = 1 > 0 by construction) ----
    total = jnp.sum(s_out, axis=(0, 1)).reshape(-1)               # [C1]
    total_sq = jnp.sum(ss_out, axis=(0, 1)).reshape(-1)           # [C1]
    mean = total / m
    var = jnp.maximum(total_sq / m - mean * mean, 0.0)            # biased variance
    inv_std = lax.rsqrt(var + BN_EPS)
    scale = params["gamma"] * inv_std                             # per-channel BN scale
    sos = (params["beta"] / scale - mean).reshape(1, 1, c1)       # shift / scale
    w2f = (params["w2"].astype(jnp.float32) * scale[None, :, None]
           ).reshape(9 * c1, cout).astype(jnp.bfloat16)           # BN scale folded into conv2

    # ---- kernel 2: BN apply + conv2 + fused 1x1 shortcut + residual ReLU ----
    flops2 = 2 * m * (9 * c1 + cin) * cout
    bytes2 = 2 * (h_out.size + d_out.size + w2f.size + params["wsc"].size) + 4 * m * cout
    out = pl.pallas_call(
        _bn_conv2_kernel,
        grid=(n, nt),
        in_specs=[
            pl.BlockSpec((1, tr, wo, c1), main_map),
            pl.BlockSpec((1, 1, wo, c1), top_map),
            pl.BlockSpec((1, 1, wo, c1), bot_map),
            pl.BlockSpec((1, tr, wo, cin), main_map),
            pl.BlockSpec((1, 1, c1), lambda ni, ti: (0, 0, 0)),
            pl.BlockSpec((9 * c1, cout), lambda ni, ti: (0, 0)),
            pl.BlockSpec((cin, cout), lambda ni, ti: (0, 0)),
        ],
        out_specs=pl.BlockSpec((1, tr, wo, cout), main_map),
        out_shape=jax.ShapeDtypeStruct((n, ho, wo, cout), jnp.float32),
        compiler_params=cparams,
        cost_estimate=pl.CostEstimate(flops=flops2, transcendentals=0,
                                      bytes_accessed=int(bytes2)),
    )(h_out, h_out, h_out, d_out, sos, w2f, params["wsc"])

    return jnp.transpose(out, (0, 3, 1, 2))          # NHWC -> NCHW


# --------------------------- pure-JAX f32 reference (spec) ----------------------------
def _ref_forward(x_nchw, p):
    x = jnp.transpose(x_nchw, (0, 2, 3, 1)).astype(jnp.float32)
    _, _, _, cin = x.shape
    wd = p["wd"].reshape(4, cin)
    d = sum(x[:, di::2, dj::2, :] * wd[di * 2 + dj]
            for di in range(2) for dj in range(2))

    def conv3(y, w):
        _, hh, ww, _ = y.shape
        yp = jnp.pad(y, ((0, 0), (1, 1), (1, 1), (0, 0)))
        out = 0.0
        for k in range(9):
            ki, kj = k // 3, k % 3
            out = out + jnp.einsum("nhwc,cd->nhwd", yp[:, ki:ki + hh, kj:kj + ww, :],
                                   w[k].astype(jnp.float32))
        return out

    h = jnp.maximum(conv3(d, p["w1"]), 0.0)
    mean = h.mean(axis=(0, 1, 2))
    var = ((h - mean) ** 2).mean(axis=(0, 1, 2))
    hb = (h - mean) * lax.rsqrt(var + BN_EPS) * p["gamma"] + p["beta"]
    y2 = conv3(hb, p["w2"])
    sc = jnp.einsum("nhwc,cd->nhwd", d, p["wsc"].astype(jnp.float32))
    out = jnp.maximum(y2 + sc, 0.0)
    return jnp.transpose(out, (0, 3, 1, 2))


if __name__ == "__main__":
    key = jax.random.PRNGKey(0)
    N, Cin, H, W = 2, 4, 16, 16
    Cout = 8
    k_x, k_p = jax.random.split(key)
    x = jax.random.normal(k_x, (N, Cin, H, W), dtype=jnp.float32)
    params = init_params(k_p, Cin, Cout)

    y_ref = _ref_forward(x, params)

    # tile_rows=4 -> grid (2 images x 2 row tiles): exercises the clamped halo-row
    # BlockSpecs, the boundary-row zeroing and the cross-tile BatchNorm reduction.
    # tile_rows=None exercises the per-generation tile/VMEM derivation (nt == 1 path).
    for tile_rows in (4, None):
        y = jax.block_until_ready(encoder_forward(x, params, tile_rows=tile_rows))
        assert y.shape == (N, Cout, H // 2, W // 2), y.shape
        assert bool(jnp.all(jnp.isfinite(y)))
        assert bool(jnp.all(y >= 0.0))                  # final ReLU
        # small deviation allowed: bf16 inputs / intermediates / MXU operands
        err = float(jnp.max(jnp.abs(y - y_ref)))
        assert err < 5e-2, f"max abs err vs f32 reference = {err} (tile_rows={tile_rows})"

    print("KERNEL_OK")
</pallas_src>

<mosaic_0001>
module attributes {stable_mosaic.version = 11 : i64} {
  func.func @_bn_conv2_kernel(%arg0: i32, %arg1: i32, %arg2: memref<1x4x8x8xbf16, #tpu.memory_space<vmem>>, %arg3: memref<1x1x8x8xbf16, #tpu.memory_space<vmem>>, %arg4: memref<1x1x8x8xbf16, #tpu.memory_space<vmem>>, %arg5: memref<1x4x8x4xbf16, #tpu.memory_space<vmem>>, %arg6: memref<1x1x8xf32, #tpu.memory_space<vmem>>, %arg7: memref<72x8xbf16, #tpu.memory_space<vmem>>, %arg8: memref<4x8xbf16, #tpu.memory_space<vmem>>, %arg9: memref<1x4x8x8xf32, #tpu.memory_space<vmem>>) attributes {dimension_semantics = [#tpu.dimension_semantics<parallel>, #tpu.dimension_semantics<parallel>], iteration_bounds = array<i64: 2, 2>, scalar_prefetch = 0 : i64, scratch_operands = 0 : i64, tpu.core_type = #tpu.core_type<tc>, window_params = [{transform_indices = @transform_0, window_bounds = array<i64: 1, 4, 8, 8>}, {transform_indices = @transform_1, window_bounds = array<i64: 1, 1, 8, 8>}, {transform_indices = @transform_2, window_bounds = array<i64: 1, 1, 8, 8>}, {transform_indices = @transform_3, window_bounds = array<i64: 1, 4, 8, 4>}, {pipeline_mode = #tpu.pipeline_mode<synchronous>, transform_indices = @transform_4, window_bounds = array<i64: 1, 1, 8>}, {pipeline_mode = #tpu.pipeline_mode<synchronous>, transform_indices = @transform_5, window_bounds = array<i64: 72, 8>}, {pipeline_mode = #tpu.pipeline_mode<synchronous>, transform_indices = @transform_6, window_bounds = array<i64: 4, 8>}, {transform_indices = @transform_7, window_bounds = array<i64: 1, 4, 8, 8>}]} {
    %c0 = arith.constant 0 : index
    %c0_0 = arith.constant 0 : index
    %c0_1 = arith.constant 0 : index
    %0 = vector.load %arg6[%c0, %c0_0, %c0_1] : memref<1x1x8xf32, #tpu.memory_space<vmem>>, vector<1x1x8xf32>
    %c0_2 = arith.constant 0 : index
    %c0_3 = arith.constant 0 : index
    %c0_4 = arith.constant 0 : index
    %c0_5 = arith.constant 0 : index
    %1 = vector.load %arg2[%c0_2, %c0_3, %c0_4, %c0_5] : memref<1x4x8x8xbf16, #tpu.memory_space<vmem>>, vector<1x4x8x8xbf16>
    %2 = vector.shape_cast %1 : vector<1x4x8x8xbf16> to vector<4x8x8xbf16>
    %3 = arith.extf %2 : vector<4x8x8xbf16> to vector<4x8x8xf32>
    %4 = vector.broadcast %0 : vector<1x1x8xf32> to vector<4x8x8xf32>
    %5 = arith.addf %3, %4 : vector<4x8x8xf32>
    %6 = arith.truncf %5 : vector<4x8x8xf32> to vector<4x8x8xbf16>
    %c0_6 = arith.constant 0 : index
    %c0_7 = arith.constant 0 : index
    %c0_8 = arith.constant 0 : index
    %c0_9 = arith.constant 0 : index
    %7 = vector.load %arg3[%c0_6, %c0_7, %c0_8, %c0_9] : memref<1x1x8x8xbf16, #tpu.memory_space<vmem>>, vector<1x1x8x8xbf16>
    %8 = vector.shape_cast %7 : vector<1x1x8x8xbf16> to vector<1x8x8xbf16>
    %9 = arith.extf %8 : vector<1x8x8xbf16> to vector<1x8x8xf32>
    %10 = vector.broadcast %0 : vector<1x1x8xf32> to vector<1x8x8xf32>
    %11 = arith.addf %9, %10 : vector<1x8x8xf32>
    %c0_10 = arith.constant 0 : index
    %c0_11 = arith.constant 0 : index
    %c0_12 = arith.constant 0 : index
    %c0_13 = arith.constant 0 : index
    %12 = vector.load %arg4[%c0_10, %c0_11, %c0_12, %c0_13] : memref<1x1x8x8xbf16, #tpu.memory_space<vmem>>, vector<1x1x8x8xbf16>
    %13 = vector.shape_cast %12 : vector<1x1x8x8xbf16> to vector<1x8x8xbf16>
    %14 = arith.extf %13 : vector<1x8x8xbf16> to vector<1x8x8xf32>
    %15 = vector.broadcast %0 : vector<1x1x8xf32> to vector<1x8x8xf32>
    %16 = arith.addf %14, %15 : vector<1x8x8xf32>
    %c0_i32 = arith.constant 0 : i32
    %17 = arith.cmpi eq, %arg1, %c0_i32 : i32
    %cst = arith.constant 0.000000e+00 : f32
    %18 = vector.broadcast %cst : f32 to vector<1x8x8xf32>
    %19 = arith.select %17, %18, %11 : vector<1x8x8xf32>
    %20 = arith.truncf %19 : vector<1x8x8xf32> to vector<1x8x8xbf16>
    %c1_i32 = arith.constant 1 : i32
    %21 = arith.cmpi eq, %arg1, %c1_i32 : i32
    %cst_14 = arith.constant 0.000000e+00 : f32
    %22 = vector.broadcast %cst_14 : f32 to vector<1x8x8xf32>
    %23 = arith.select %21, %22, %16 : vector<1x8x8xf32>
    %24 = arith.truncf %23 : vector<1x8x8xf32> to vector<1x8x8xbf16>
    %25 = tpu.concatenate %20, %6, %24 in 0 : vector<1x8x8xbf16>, vector<4x8x8xbf16>, vector<1x8x8xbf16> -> vector<6x8x8xbf16>
    %cst_15 = arith.constant 0.000000e+00 : bf16
    %26 = vector.broadcast %cst_15 : bf16 to vector<6x1x8xbf16>
    %27 = vector.extract_strided_slice %25 {offsets = [0, 0, 0], sizes = [6, 7, 8], strides = [1, 1, 1]} : vector<6x8x8xbf16> to vector<6x7x8xbf16>
    %28 = tpu.concatenate %26, %27 in 1 : vector<6x1x8xbf16>, vector<6x7x8xbf16> -> vector<6x8x8xbf16>
    %29 = vector.extract_strided_slice %25 {offsets = [0, 1, 0], sizes = [6, 7, 8], strides = [1, 1, 1]} : vector<6x8x8xbf16> to vector<6x7x8xbf16>
    %30 = tpu.concatenate %29, %26 in 1 : vector<6x7x8xbf16>, vector<6x1x8xbf16> -> vector<6x8x8xbf16>
    %31 = tpu.concatenate %28, %25, %30 in 2 : vector<6x8x8xbf16>, vector<6x8x8xbf16>, vector<6x8x8xbf16> -> vector<6x8x24xbf16>
    %32 = vector.extract_strided_slice %31 {offsets = [0, 0, 0], sizes = [4, 8, 24], strides = [1, 1, 1]} : vector<6x8x24xbf16> to vector<4x8x24xbf16>
    %33 = vector.extract_strided_slice %31 {offsets = [1, 0, 0], sizes = [4, 8, 24], strides = [1, 1, 1]} : vector<6x8x24xbf16> to vector<4x8x24xbf16>
    %34 = vector.extract_strided_slice %31 {offsets = [2, 0, 0], sizes = [4, 8, 24], strides = [1, 1, 1]} : vector<6x8x24xbf16> to vector<4x8x24xbf16>
    %35 = tpu.concatenate %32, %33, %34 in 2 : vector<4x8x24xbf16>, vector<4x8x24xbf16>, vector<4x8x24xbf16> -> vector<4x8x72xbf16>
    %c0_16 = arith.constant 0 : index
    %c0_17 = arith.constant 0 : index
    %c0_18 = arith.constant 0 : index
    %c0_19 = arith.constant 0 : index
    %36 = vector.load %arg5[%c0_16, %c0_17, %c0_18, %c0_19] : memref<1x4x8x4xbf16, #tpu.memory_space<vmem>>, vector<1x4x8x4xbf16>
    %37 = vector.shape_cast %36 : vector<1x4x8x4xbf16> to vector<4x8x4xbf16>
    %38 = vector.shape_cast %37 : vector<4x8x4xbf16> to vector<32x4xbf16>
    %c0_20 = arith.constant 0 : index
    %c0_21 = arith.constant 0 : index
    %39 = vector.load %arg8[%c0_20, %c0_21] : memref<4x8xbf16, #tpu.memory_space<vmem>>, vector<4x8xbf16>
    %cst_22 = arith.constant dense<0.000000e+00> : vector<32x8xf32>
    %40 = tpu.matmul %38, %39, %cst_22 {dimension_numbers = #tpu.dot_dimension_numbers<[1], [0], [0], [1], [0, 0, 1, 1], [], []>} : vector<32x4xbf16>, vector<4x8xbf16>, vector<32x8xf32> -> vector<32x8xf32>
    %41 = vector.shape_cast %35 : vector<4x8x72xbf16> to vector<32x72xbf16>
    %c0_23 = arith.constant 0 : index
    %c0_24 = arith.constant 0 : index
    %42 = vector.load %arg7[%c0_23, %c0_24] : memref<72x8xbf16, #tpu.memory_space<vmem>>, vector<72x8xbf16>
    %cst_25 = arith.constant dense<0.000000e+00> : vector<32x8xf32>
    %43 = tpu.matmul %41, %42, %cst_25 {dimension_numbers = #tpu.dot_dimension_numbers<[1], [0], [0], [1], [0, 0, 1, 1], [], []>} : vector<32x72xbf16>, vector<72x8xbf16>, vector<32x8xf32> -> vector<32x8xf32>
    %44 = arith.addf %40, %43 : vector<32x8xf32>
    %cst_26 = arith.constant 0.000000e+00 : f32
    %45 = vector.broadcast %cst_26 : f32 to vector<32x8xf32>
    %46 = arith.maximumf %44, %45 : vector<32x8xf32>
    %47 = vector.shape_cast %46 : vector<32x8xf32> to vector<4x8x8xf32>
    %c0_27 = arith.constant 0 : index
    %c0_28 = arith.constant 0 : index
    %c0_29 = arith.constant 0 : index
    %c0_30 = arith.constant 0 : index
    %48 = vector.load %arg9[%c0_27, %c0_28, %c0_29, %c0_30] : memref<1x4x8x8xf32, #tpu.memory_space<vmem>>, vector<1x4x8x8xf32>
    %49 = vector.shape_cast %48 : vector<1x4x8x8xf32> to vector<4x8x8xf32>
    %50 = vector.shape_cast %47 : vector<4x8x8xf32> to vector<1x4x8x8xf32>
    tpu.vector_store %arg9[%c0_27, %c0_28, %c0_29, %c0_30], %50 {strides = array<i32>} : memref<1x4x8x8xf32, #tpu.memory_space<vmem>>, vector<1x4x8x8xf32>,
    return
  }
  func.func @transform_0(%arg0: i32, %arg1: i32) -> (i32, i32, i32, i32) {
    %c0_i32 = arith.constant 0 : i32
    %c0_i32_0 = arith.constant 0 : i32
    %c0_i32_1 = arith.constant 0 : i32
    return %arg0, %arg1, %c0_i32, %c0_i32_0 : i32, i32, i32, i32
  }
  func.func @transform_1(%arg0: i32, %arg1: i32) -> (i32, i32, i32, i32) {
    %c4_i32 = arith.constant 4 : i32
    %0 = arith.muli %arg1, %c4_i32 : i32
    %c1_i32 = arith.constant 1 : i32
    %1 = arith.subi %0, %c1_i32 : i32
    %c0_i32 = arith.constant 0 : i32
    %2 = arith.maxsi %1, %c0_i32 : i32
    %c0_i32_0 = arith.constant 0 : i32
    %c0_i32_1 = arith.constant 0 : i32
    %c0_i32_2 = arith.constant 0 : i32
    return %arg0, %2, %c0_i32_0, %c0_i32_1 : i32, i32, i32, i32
  }
  func.func @transform_2(%arg0: i32, %arg1: i32) -> (i32, i32, i32, i32) {
    %c4_i32 = arith.constant 4 : i32
    %0 = arith.muli %arg1, %c4_i32 : i32
    %c4_i32_0 = arith.constant 4 : i32
    %1 = arith.addi %0, %c4_i32_0 : i32
    %c7_i32 = arith.constant 7 : i32
    %2 = arith.minsi %1, %c7_i32 : i32
    %c0_i32 = arith.constant 0 : i32
    %c0_i32_1 = arith.constant 0 : i32
    %c0_i32_2 = arith.constant 0 : i32
    return %arg0, %2, %c0_i32, %c0_i32_1 : i32, i32, i32, i32
  }
  func.func @transform_3(%arg0: i32, %arg1: i32) -> (i32, i32, i32, i32) {
    %c0_i32 = arith.constant 0 : i32
    %c0_i32_0 = arith.constant 0 : i32
    %c0_i32_1 = arith.constant 0 : i32
    return %arg0, %arg1, %c0_i32, %c0_i32_0 : i32, i32, i32, i32
  }
  func.func @transform_4(%arg0: i32, %arg1: i32) -> (i32, i32, i32) {
    %c0_i32 = arith.constant 0 : i32
    %c0_i32_0 = arith.constant 0 : i32
    %c0_i32_1 = arith.constant 0 : i32
    %c0_i32_2 = arith.constant 0 : i32
    return %c0_i32, %c0_i32_0, %c0_i32_1 : i32, i32, i32
  }
  func.func @transform_5(%arg0: i32, %arg1: i32) -> (i32, i32) {
    %c0_i32 = arith.constant 0 : i32
    %c0_i32_0 = arith.constant 0 : i32
    %c0_i32_1 = arith.constant 0 : i32
    return %c0_i32, %c0_i32_0 : i32, i32
  }
  func.func @transform_6(%arg0: i32, %arg1: i32) -> (i32, i32) {
    %c0_i32 = arith.constant 0 : i32
    %c0_i32_0 = arith.constant 0 : i32
    %c0_i32_1 = arith.constant 0 : i32
    return %c0_i32, %c0_i32_0 : i32, i32
  }
  func.func @transform_7(%arg0: i32, %arg1: i32) -> (i32, i32, i32, i32) {
    %c0_i32 = arith.constant 0 : i32
    %c0_i32_0 = arith.constant 0 : i32
    %c0_i32_1 = arith.constant 0 : i32
    return %arg0, %arg1, %c0_i32, %c0_i32_0 : i32, i32, i32, i32
  }
}

module attributes {stable_mosaic.version = 11 : i64} {
  func.func @_ds_conv1_kernel(%arg0: i32, %arg1: i32, %arg2: memref<1x4x8x16xbf16, #tpu.memory_space<vmem>>, %arg3: memref<1x1x8x16xbf16, #tpu.memory_space<vmem>>, %arg4: memref<1x1x8x16xbf16, #tpu.memory_space<vmem>>, %arg5: memref<4x1x4xf32, #tpu.memory_space<vmem>>, %arg6: memref<36x8xbf16, #tpu.memory_space<vmem>>, %arg7: memref<1x4x8x4xbf16, #tpu.memory_space<vmem>>, %arg8: memref<1x4x8x8xbf16, #tpu.memory_space<vmem>>, %arg9: memref<1x1x1x8xf32, #tpu.memory_space<vmem>>, %arg10: memref<1x1x1x8xf32, #tpu.memory_space<vmem>>) attributes {dimension_semantics = [#tpu.dimension_semantics<parallel>, #tpu.dimension_semantics<parallel>], iteration_bounds = array<i64: 2, 2>, scalar_prefetch = 0 : i64, scratch_operands = 0 : i64, tpu.core_type = #tpu.core_type<tc>, window_params = [{transform_indices = @transform_0, window_bounds = array<i64: 1, 4, 8, 16>}, {transform_indices = @transform_1, window_bounds = array<i64: 1, 1, 8, 16>}, {transform_indices = @transform_2, window_bounds = array<i64: 1, 1, 8, 16>}, {pipeline_mode = #tpu.pipeline_mode<synchronous>, transform_indices = @transform_3, window_bounds = array<i64: 4, 1, 4>}, {pipeline_mode = #tpu.pipeline_mode<synchronous>, transform_indices = @transform_4, window_bounds = array<i64: 36, 8>}, {transform_indices = @transform_5, window_bounds = array<i64: 1, 4, 8, 4>}, {transform_indices = @transform_6, window_bounds = array<i64: 1, 4, 8, 8>}, {transform_indices = @transform_7, window_bounds = array<i64: 1, 1, 1, 8>}, {transform_indices = @transform_8, window_bounds = array<i64: 1, 1, 1, 8>}]} {
    %c0 = arith.constant 0 : index
    %c0_0 = arith.constant 0 : index
    %c0_1 = arith.constant 0 : index
    %c0_2 = arith.constant 0 : index
    %0 = vector.load %arg2[%c0, %c0_0, %c0_1, %c0_2] : memref<1x4x8x16xbf16, #tpu.memory_space<vmem>>, vector<1x4x8x16xbf16>
    %1 = vector.shape_cast %0 : vector<1x4x8x16xbf16> to vector<4x8x16xbf16>
    %2 = arith.extf %1 : vector<4x8x16xbf16> to vector<4x8x16xf32>
    %c0_3 = arith.constant 0 : index
    %c0_4 = arith.constant 0 : index
    %c0_5 = arith.constant 0 : index
    %c0_6 = arith.constant 0 : index
    %3 = vector.load %arg3[%c0_3, %c0_4, %c0_5, %c0_6] : memref<1x1x8x16xbf16, #tpu.memory_space<vmem>>, vector<1x1x8x16xbf16>
    %4 = vector.shape_cast %3 : vector<1x1x8x16xbf16> to vector<1x8x16xbf16>
    %5 = arith.extf %4 : vector<1x8x16xbf16> to vector<1x8x16xf32>
    %c0_7 = arith.constant 0 : index
    %c0_8 = arith.constant 0 : index
    %c0_9 = arith.constant 0 : index
    %c0_10 = arith.constant 0 : index
    %6 = vector.load %arg4[%c0_7, %c0_8, %c0_9, %c0_10] : memref<1x1x8x16xbf16, #tpu.memory_space<vmem>>, vector<1x1x8x16xbf16>
    %7 = vector.shape_cast %6 : vector<1x1x8x16xbf16> to vector<1x8x16xbf16>
    %8 = arith.extf %7 : vector<1x8x16xbf16> to vector<1x8x16xf32>
    %c0_i32 = arith.constant 0 : i32
    %9 = arith.cmpi eq, %arg1, %c0_i32 : i32
    %cst = arith.constant 0.000000e+00 : f32
    %10 = vector.broadcast %cst : f32 to vector<1x8x16xf32>
    %11 = arith.select %9, %10, %5 : vector<1x8x16xf32>
    %c1_i32 = arith.constant 1 : i32
    %12 = arith.cmpi eq, %arg1, %c1_i32 : i32
    %cst_11 = arith.constant 0.000000e+00 : f32
    %13 = vector.broadcast %cst_11 : f32 to vector<1x8x16xf32>
    %14 = arith.select %12, %13, %8 : vector<1x8x16xf32>
    %15 = tpu.concatenate %11, %2, %14 in 0 : vector<1x8x16xf32>, vector<4x8x16xf32>, vector<1x8x16xf32> -> vector<6x8x16xf32>
    %c0_12 = arith.constant 0 : index
    %c0_13 = arith.constant 0 : index
    %c0_14 = arith.constant 0 : index
    %16 = vector.load %arg5[%c0_12, %c0_13, %c0_14] : memref<4x1x4xf32, #tpu.memory_space<vmem>>, vector<4x1x4xf32>
    %17 = vector.extract_strided_slice %15 {offsets = [0, 0, 0], sizes = [6, 8, 4], strides = [1, 1, 1]} : vector<6x8x16xf32> to vector<6x8x4xf32>
    %18 = vector.extract_strided_slice %16 {offsets = [0, 0, 0], sizes = [1, 1, 4], strides = [1, 1, 1]} : vector<4x1x4xf32> to vector<1x1x4xf32>
    %19 = vector.shape_cast %18 : vector<1x1x4xf32> to vector<1x4xf32>
    %20 = vector.shape_cast %19 : vector<1x4xf32> to vector<1x1x4xf32>
    %21 = vector.broadcast %20 : vector<1x1x4xf32> to vector<6x8x4xf32>
    %22 = arith.mulf %17, %21 : vector<6x8x4xf32>
    %23 = vector.extract_strided_slice %15 {offsets = [0, 0, 4], sizes = [6, 8, 4], strides = [1, 1, 1]} : vector<6x8x16xf32> to vector<6x8x4xf32>
    %24 = vector.extract_strided_slice %16 {offsets = [1, 0, 0], sizes = [1, 1, 4], strides = [1, 1, 1]} : vector<4x1x4xf32> to vector<1x1x4xf32>
    %25 = vector.shape_cast %24 : vector<1x1x4xf32> to vector<1x4xf32>
    %26 = vector.shape_cast %25 : vector<1x4xf32> to vector<1x1x4xf32>
    %27 = vector.broadcast %26 : vector<1x1x4xf32> to vector<6x8x4xf32>
    %28 = arith.mulf %23, %27 : vector<6x8x4xf32>
    %29 = arith.addf %22, %28 : vector<6x8x4xf32>
    %30 = vector.extract_strided_slice %15 {offsets = [0, 0, 8], sizes = [6, 8, 4], strides = [1, 1, 1]} : vector<6x8x16xf32> to vector<6x8x4xf32>
    %31 = vector.extract_strided_slice %16 {offsets = [2, 0, 0], sizes = [1, 1, 4], strides = [1, 1, 1]} : vector<4x1x4xf32> to vector<1x1x4xf32>
    %32 = vector.shape_cast %31 : vector<1x1x4xf32> to vector<1x4xf32>
    %33 = vector.shape_cast %32 : vector<1x4xf32> to vector<1x1x4xf32>
    %34 = vector.broadcast %33 : vector<1x1x4xf32> to vector<6x8x4xf32>
    %35 = arith.mulf %30, %34 : vector<6x8x4xf32>
    %36 = arith.addf %29, %35 : vector<6x8x4xf32>
    %37 = vector.extract_strided_slice %15 {offsets = [0, 0, 12], sizes = [6, 8, 4], strides = [1, 1, 1]} : vector<6x8x16xf32> to vector<6x8x4xf32>
    %38 = vector.extract_strided_slice %16 {offsets = [3, 0, 0], sizes = [1, 1, 4], strides = [1, 1, 1]} : vector<4x1x4xf32> to vector<1x1x4xf32>
    %39 = vector.shape_cast %38 : vector<1x1x4xf32> to vector<1x4xf32>
    %40 = vector.shape_cast %39 : vector<1x4xf32> to vector<1x1x4xf32>
    %41 = vector.broadcast %40 : vector<1x1x4xf32> to vector<6x8x4xf32>
    %42 = arith.mulf %37, %41 : vector<6x8x4xf32>
    %43 = arith.addf %36, %42 : vector<6x8x4xf32>
    %44 = vector.extract_strided_slice %43 {offsets = [1, 0, 0], sizes = [4, 8, 4], strides = [1, 1, 1]} : vector<6x8x4xf32> to vector<4x8x4xf32>
    %45 = arith.truncf %44 : vector<4x8x4xf32> to vector<4x8x4xbf16>
    %c0_15 = arith.constant 0 : index
    %c0_16 = arith.constant 0 : index
    %c0_17 = arith.constant 0 : index
    %c0_18 = arith.constant 0 : index
    %46 = vector.load %arg7[%c0_15, %c0_16, %c0_17, %c0_18] : memref<1x4x8x4xbf16, #tpu.memory_space<vmem>>, vector<1x4x8x4xbf16>
    %47 = vector.shape_cast %46 : vector<1x4x8x4xbf16> to vector<4x8x4xbf16>
    %48 = vector.shape_cast %45 : vector<4x8x4xbf16> to vector<1x4x8x4xbf16>
    tpu.vector_store %arg7[%c0_15, %c0_16, %c0_17, %c0_18], %48 {strides = array<i32>} : memref<1x4x8x4xbf16, #tpu.memory_space<vmem>>, vector<1x4x8x4xbf16>,
    %49 = arith.truncf %43 : vector<6x8x4xf32> to vector<6x8x4xbf16>
    %cst_19 = arith.constant 0.000000e+00 : bf16
    %50 = vector.broadcast %cst_19 : bf16 to vector<6x1x4xbf16>
    %51 = vector.extract_strided_slice %49 {offsets = [0, 0, 0], sizes = [6, 7, 4], strides = [1, 1, 1]} : vector<6x8x4xbf16> to vector<6x7x4xbf16>
    %52 = tpu.concatenate %50, %51 in 1 : vector<6x1x4xbf16>, vector<6x7x4xbf16> -> vector<6x8x4xbf16>
    %53 = vector.extract_strided_slice %49 {offsets = [0, 1, 0], sizes = [6, 7, 4], strides = [1, 1, 1]} : vector<6x8x4xbf16> to vector<6x7x4xbf16>
    %54 = tpu.concatenate %53, %50 in 1 : vector<6x7x4xbf16>, vector<6x1x4xbf16> -> vector<6x8x4xbf16>
    %55 = tpu.concatenate %52, %49, %54 in 2 : vector<6x8x4xbf16>, vector<6x8x4xbf16>, vector<6x8x4xbf16> -> vector<6x8x12xbf16>
    %56 = vector.extract_strided_slice %55 {offsets = [0, 0, 0], sizes = [4, 8, 12], strides = [1, 1, 1]} : vector<6x8x12xbf16> to vector<4x8x12xbf16>
    %57 = vector.extract_strided_slice %55 {offsets = [1, 0, 0], sizes = [4, 8, 12], strides = [1, 1, 1]} : vector<6x8x12xbf16> to vector<4x8x12xbf16>
    %58 = vector.extract_strided_slice %55 {offsets = [2, 0, 0], sizes = [4, 8, 12], strides = [1, 1, 1]} : vector<6x8x12xbf16> to vector<4x8x12xbf16>
    %59 = tpu.concatenate %56, %57, %58 in 2 : vector<4x8x12xbf16>, vector<4x8x12xbf16>, vector<4x8x12xbf16> -> vector<4x8x36xbf16>
    %60 = vector.shape_cast %59 : vector<4x8x36xbf16> to vector<32x36xbf16>
    %c0_20 = arith.constant 0 : index
    %c0_21 = arith.constant 0 : index
    %61 = vector.load %arg6[%c0_20, %c0_21] : memref<36x8xbf16, #tpu.memory_space<vmem>>, vector<36x8xbf16>
    %cst_22 = arith.constant dense<0.000000e+00> : vector<32x8xf32>
    %62 = tpu.matmul %60, %61, %cst_22 {dimension_numbers = #tpu.dot_dimension_numbers<[1], [0], [0], [1], [0, 0, 1, 1], [], []>} : vector<32x36xbf16>, vector<36x8xbf16>, vector<32x8xf32> -> vector<32x8xf32>
    %cst_23 = arith.constant 0.000000e+00 : f32
    %63 = vector.broadcast %cst_23 : f32 to vector<32x8xf32>
    %64 = arith.maximumf %62, %63 : vector<32x8xf32>
    %65 = vector.shape_cast %64 : vector<32x8xf32> to vector<4x8x8xf32>
    %66 = arith.truncf %65 : vector<4x8x8xf32> to vector<4x8x8xbf16>
    %c0_24 = arith.constant 0 : index
    %c0_25 = arith.constant 0 : index
    %c0_26 = arith.constant 0 : index
    %c0_27 = arith.constant 0 : index
    %67 = vector.load %arg8[%c0_24, %c0_25, %c0_26, %c0_27] : memref<1x4x8x8xbf16, #tpu.memory_space<vmem>>, vector<1x4x8x8xbf16>
    %68 = vector.shape_cast %67 : vector<1x4x8x8xbf16> to vector<4x8x8xbf16>
    %69 = vector.shape_cast %66 : vector<4x8x8xbf16> to vector<1x4x8x8xbf16>
    tpu.vector_store %arg8[%c0_24, %c0_25, %c0_26, %c0_27], %69 {strides = array<i32>} : memref<1x4x8x8xbf16, #tpu.memory_space<vmem>>, vector<1x4x8x8xbf16>,
    %cst_28 = arith.constant dense<0.000000e+00> : vector<8xf32>
    %70 = vector.multi_reduction <add>, %64, %cst_28 [0] : vector<32x8xf32> to vector<8xf32>
    %71 = vector.shape_cast %70 : vector<8xf32> to vector<1x8xf32>
    %72 = vector.shape_cast %71 : vector<1x8xf32> to vector<1x1x1x8xf32>
    %c0_29 = arith.constant 0 : index
    %c0_30 = arith.constant 0 : index
    %c0_31 = arith.constant 0 : index
    %c0_32 = arith.constant 0 : index
    %73 = vector.load %arg9[%c0_29, %c0_30, %c0_31, %c0_32] : memref<1x1x1x8xf32, #tpu.memory_space<vmem>>, vector<1x1x1x8xf32>
    tpu.vector_store %arg9[%c0_29, %c0_30, %c0_31, %c0_32], %72 {strides = array<i32>} : memref<1x1x1x8xf32, #tpu.memory_space<vmem>>, vector<1x1x1x8xf32>,
    %74 = arith.mulf %64, %64 : vector<32x8xf32>
    %cst_33 = arith.constant dense<0.000000e+00> : vector<8xf32>
    %75 = vector.multi_reduction <add>, %74, %cst_33 [0] : vector<32x8xf32> to vector<8xf32>
    %76 = vector.shape_cast %75 : vector<8xf32> to vector<1x8xf32>
    %77 = vector.shape_cast %76 : vector<1x8xf32> to vector<1x1x1x8xf32>
    %c0_34 = arith.constant 0 : index
    %c0_35 = arith.constant 0 : index
    %c0_36 = arith.constant 0 : index
    %c0_37 = arith.constant 0 : index
    %78 = vector.load %arg10[%c0_34, %c0_35, %c0_36, %c0_37] : memref<1x1x1x8xf32, #tpu.memory_space<vmem>>, vector<1x1x1x8xf32>
    tpu.vector_store %arg10[%c0_34, %c0_35, %c0_36, %c0_37], %77 {strides = array<i32>} : memref<1x1x1x8xf32, #tpu.memory_space<vmem>>, vector<1x1x1x8xf32>,
    return
  }
  func.func @transform_0(%arg0: i32, %arg1: i32) -> (i32, i32, i32, i32) {
    %c0_i32 = arith.constant 0 : i32
    %c0_i32_0 = arith.constant 0 : i32
    %c0_i32_1 = arith.constant 0 : i32
    return %arg0, %arg1, %c0_i32, %c0_i32_0 : i32, i32, i32, i32
  }
  func.func @transform_1(%arg0: i32, %arg1: i32) -> (i32, i32, i32, i32) {
    %c4_i32 = arith.constant 4 : i32
    %0 = arith.muli %arg1, %c4_i32 : i32
    %c1_i32 = arith.constant 1 : i32
    %1 = arith.subi %0, %c1_i32 : i32
    %c0_i32 = arith.constant 0 : i32
    %2 = arith.maxsi %1, %c0_i32 : i32
    %c0_i32_0 = arith.constant 0 : i32
    %c0_i32_1 = arith.constant 0 : i32
    %c0_i32_2 = arith.constant 0 : i32
    return %arg0, %2, %c0_i32_0, %c0_i32_1 : i32, i32, i32, i32
  }
  func.func @transform_2(%arg0: i32, %arg1: i32) -> (i32, i32, i32, i32) {
    %c4_i32 = arith.constant 4 : i32
    %0 = arith.muli %arg1, %c4_i32 : i32
    %c4_i32_0 = arith.constant 4 : i32
    %1 = arith.addi %0, %c4_i32_0 : i32
    %c7_i32 = arith.constant 7 : i32
    %2 = arith.minsi %1, %c7_i32 : i32
    %c0_i32 = arith.constant 0 : i32
    %c0_i32_1 = arith.constant 0 : i32
    %c0_i32_2 = arith.constant 0 : i32
    return %arg0, %2, %c0_i32, %c0_i32_1 : i32, i32, i32, i32
  }
  func.func @transform_3(%arg0: i32, %arg1: i32) -> (i32, i32, i32) {
    %c0_i32 = arith.constant 0 : i32
    %c0_i32_0 = arith.constant 0 : i32
    %c0_i32_1 = arith.constant 0 : i32
    %c0_i32_2 = arith.constant 0 : i32
    return %c0_i32, %c0_i32_0, %c0_i32_1 : i32, i32, i32
  }
  func.func @transform_4(%arg0: i32, %arg1: i32) -> (i32, i32) {
    %c0_i32 = arith.constant 0 : i32
    %c0_i32_0 = arith.constant 0 : i32
    %c0_i32_1 = arith.constant 0 : i32
    return %c0_i32, %c0_i32_0 : i32, i32
  }
  func.func @transform_5(%arg0: i32, %arg1: i32) -> (i32, i32, i32, i32) {
    %c0_i32 = arith.constant 0 : i32
    %c0_i32_0 = arith.constant 0 : i32
    %c0_i32_1 = arith.constant 0 : i32
    return %arg0, %arg1, %c0_i32, %c0_i32_0 : i32, i32, i32, i32
  }
  func.func @transform_6(%arg0: i32, %arg1: i32) -> (i32, i32, i32, i32) {
    %c0_i32 = arith.constant 0 : i32
    %c0_i32_0 = arith.constant 0 : i32
    %c0_i32_1 = arith.constant 0 : i32
    return %arg0, %arg1, %c0_i32, %c0_i32_0 : i32, i32, i32, i32
  }
  func.func @transform_7(%arg0: i32, %arg1: i32) -> (i32, i32, i32, i32) {
    %c0_i32 = arith.constant 0 : i32
    %c0_i32_0 = arith.constant 0 : i32
    %c0_i32_1 = arith.constant 0 : i32
    return %arg0, %arg1, %c0_i32, %c0_i32_0 : i32, i32, i32, i32
  }
  func.func @transform_8(%arg0: i32, %arg1: i32) -> (i32, i32, i32, i32) {
    %c0_i32 = arith.constant 0 : i32
    %c0_i32_0 = arith.constant 0 : i32
    %c0_i32_1 = arith.constant 0 : i32
    return %arg0, %arg1, %c0_i32, %c0_i32_0 : i32, i32, i32, i32
  }
}

</mosaic_0001>

<llo_original>
// kernel: encoder_forward.3
$region0: #{encoder_forward.3}
  #allocation0 [shape = 'u32[]', space=smem, size = 0x4, offset = 0x4, fixed_abs, tag = 'smem constant byte address 0x4 - core index']
  #allocation1 [shape = 'u32[144,128]{1,0:T(1,128)}', space=vmem, size = 0x12000, scoped, tag = 'internal scratch']
  %s0 = inlined_call_operand.vmem [shape: bf16[2,8,8,8], index: 0, kind: input, shape index: {}, may-alias: {0,1,2}]
  %s1 = inlined_call_operand.vmem [shape: bf16[2,8,8,8], index: 1, kind: input, shape index: {}, may-alias: {0,1,2}]
  %s2 = inlined_call_operand.vmem [shape: bf16[2,8,8,8], index: 2, kind: input, shape index: {}, may-alias: {0,1,2}]
  %s3 = inlined_call_operand.vmem [shape: bf16[2,8,8,4], index: 3, kind: input, shape index: {}]
  %s4 = inlined_call_operand.vmem [shape: f32[1,1,8], index: 4, kind: input, shape index: {}]
  %s5 = inlined_call_operand.vmem [shape: bf16[72,8], index: 5, kind: input, shape index: {}]
  %s6 = inlined_call_operand.vmem [shape: bf16[4,8], index: 6, kind: input, shape index: {}]
  %s7 = inlined_call_operand.vmem [shape: f32[2,8,8,8], index: 7, kind: output, shape index: {}]
  %s8 = sld [smem:[#allocation0]]
  $region61: #{encoder_forward.3} parent=0
    _
  %s10 = ssub.s32 1, %s8
  %s11 = scalar_select 0, %s10, %s8
  loop: start=0, step=1, limit=6
  $region2: #{encoder_forward.3} parent=0 // loop_pre_header
    _
  $region3: #{encoder_forward.3} parent=0 // loop_header
    %s13 = sphi 0, %s17
    %p14 = scmp.ge.s32.totalorder %s13, 6
    %s20 = sphi 0, %s32
    %s21 = sphi 0, %s28
    %s22 = sphi 0, %s20
    %s23 = sphi 0, %s21
    %s24 = sphi 0, %s22
    %s25 = sphi 0, %s23
    %s37 = sphi 0, %s39
    %s40 = sphi 0, %s37
    %s41 = sphi 0, %s40
    %s57 = sphi 0, %s41
    %s73 = sphi 0, %s75
    %s76 = sphi 0, %s73
    %s77 = sphi 0, %s76
    %s93 = sphi 0, %s77
    %s109 = sphi 0, %s111
    %s112 = sphi 0, %s109
    %s113 = sphi 0, %s112
    %s129 = sphi 0, %s113
    %s137 = sphi 0, %s139
    %s140 = sphi 0, %s137
    %s141 = sphi 0, %s140
    %s157 = sphi 0, %s141
    %s161 = sphi 0, %s161
    %s163 = sphi 0, %s161
    %s164 = sphi 0, %s163
    %s178 = sphi 0, %s164
    %s182 = sphi 0, %s182
    %s184 = sphi 0, %s182
    %s185 = sphi 0, %s184
    %s199 = sphi 0, %s185
    %s203 = sphi 0, %s203
    %s205 = sphi 0, %s203
    %s206 = sphi 0, %s205
    %s220 = sphi 0, %s206
    %s228 = sphi 0, %s230
    %s231 = sphi 0, %s228
    %s232 = sphi 0, %s231
    %s248 = sphi 0, %s232
  $region4: #{encoder_forward.3} parent=0 // loop_header_branch
    %16 = sbr.rel (%p14) target = $region8
  $region5: #{encoder_forward.3} parent=0 // loop_body
    %s18 = ssub.s32 %s13, 1
    %s19 = ssub.s32 %s13, 2
    %s26 = sadd.s32 1, %s21
    %p27 = scmp.ge.s32.totalorder %s26, 2
    %s28 = scalar_select %p27, 0, %s26
    %s29 = sadd.s32 1, %s20
    %s30 = scalar_select %p27, %s29, %s20
    %p31 = scmp.ge.s32.totalorder %s30, 2
    %s32 = scalar_select %p31, 0, %s30
    %s33 = ssub.s32 %s20, %s32
    %s34 = ssub.s32 %s21, %s28
    %s35 = sor.u32 %s33, %s34
    %p36 = scmp.eq.s32.totalorder %s35, 0
    %s38 = sadd.s32 %s37, 1
    %s39 = scalar_select %p36, %s37, %s38
    %p42 = pneg %p36
    %p43 = scmp.eq.s32.totalorder %s13, 3
    %p44 = por %p42, %p43
    %p45 = scmp.ne.s32.totalorder %s37, %s40
    %p46 = scmp.eq.s32.totalorder %s13, 0
    %p47 = por %p45, %p46
    %p48 = scmp.ne.s32.totalorder %s37, %s40
    %p49 = scmp.eq.s32.totalorder %s18, 3
    %p50 = por %p48, %p49
    %p51 = scmp.ne.s32.totalorder %s40, %s41
    %p52 = scmp.eq.s32.totalorder %s18, 0
    %p53 = por %p51, %p52
    %p54 = scmp.ne.s32.totalorder %s40, %s41
    %p55 = scmp.eq.s32.totalorder %s19, 3
    %p56 = por %p54, %p55
    %p58 = scmp.ne.s32.totalorder %s41, %s57
    %p59 = scmp.eq.s32.totalorder %s19, 0
    %p60 = por %p58, %p59
    %s61 = smul.u32 %s21, 4
    %s62 = ssub.s32 %s61, 1
    %p63 = scmp.gt.s32.totalorder %s62, 0
    %s64 = scalar_select %p63, %s62, 0
    %s65 = smul.u32 %s28, 4
    %s66 = ssub.s32 %s65, 1
    %p67 = scmp.gt.s32.totalorder %s66, 0
    %s68 = scalar_select %p67, %s66, 0
    %s69 = ssub.s32 %s20, %s32
    %s70 = ssub.s32 %s64, %s68
    %s71 = sor.u32 %s69, %s70
    %p72 = scmp.eq.s32.totalorder %s71, 0
    %s74 = sadd.s32 %s73, 1
    %s75 = scalar_select %p72, %s73, %s74
    %p78 = pneg %p72
    %p79 = scmp.eq.s32.totalorder %s13, 3
    %p80 = por %p78, %p79
    %p81 = scmp.ne.s32.totalorder %s73, %s76
    %p82 = scmp.eq.s32.totalorder %s13, 0
    %p83 = por %p81, %p82
    %p84 = scmp.ne.s32.totalorder %s73, %s76
    %p85 = scmp.eq.s32.totalorder %s18, 3
    %p86 = por %p84, %p85
    %p87 = scmp.ne.s32.totalorder %s76, %s77
    %p88 = scmp.eq.s32.totalorder %s18, 0
    %p89 = por %p87, %p88
    %p90 = scmp.ne.s32.totalorder %s76, %s77
    %p91 = scmp.eq.s32.totalorder %s19, 3
    %p92 = por %p90, %p91
    %p94 = scmp.ne.s32.totalorder %s77, %s93
    %p95 = scmp.eq.s32.totalorder %s19, 0
    %p96 = por %p94, %p95
    %s97 = smul.u32 %s21, 4
    %s98 = sadd.s32 %s97, 4
    %p99 = scmp.lt.s32.totalorder %s98, 7
    %s100 = scalar_select %p99, %s98, 7
    %s101 = smul.u32 %s28, 4
    %s102 = sadd.s32 %s101, 4
    %p103 = scmp.lt.s32.totalorder %s102, 7
    %s104 = scalar_select %p103, %s102, 7
    %s105 = ssub.s32 %s20, %s32
    %s106 = ssub.s32 %s100, %s104
    %s107 = sor.u32 %s105, %s106
    %p108 = scmp.eq.s32.totalorder %s107, 0
    %s110 = sadd.s32 %s109, 1
    %s111 = scalar_select %p108, %s109, %s110
    %p114 = pneg %p108
    %p115 = scmp.eq.s32.totalorder %s13, 3
    %p116 = por %p114, %p115
    %p117 = scmp.ne.s32.totalorder %s109, %s112
    %p118 = scmp.eq.s32.totalorder %s13, 0
    %p119 = por %p117, %p118
    %p120 = scmp.ne.s32.totalorder %s109, %s112
    %p121 = scmp.eq.s32.totalorder %s18, 3
    %p122 = por %p120, %p121
    %p123 = scmp.ne.s32.totalorder %s112, %s113
    %p124 = scmp.eq.s32.totalorder %s18, 0
    %p125 = por %p123, %p124
    %p126 = scmp.ne.s32.totalorder %s112, %s113
    %p127 = scmp.eq.s32.totalorder %s19, 3
    %p128 = por %p126, %p127
    %p130 = scmp.ne.s32.totalorder %s113, %s129
    %p131 = scmp.eq.s32.totalorder %s19, 0
    %p132 = por %p130, %p131
    %s133 = ssub.s32 %s20, %s32
    %s134 = ssub.s32 %s21, %s28
    %s135 = sor.u32 %s133, %s134
    %p136 = scmp.eq.s32.totalorder %s135, 0
    %s138 = sadd.s32 %s137, 1
    %s139 = scalar_select %p136, %s137, %s138
    %p142 = pneg %p136
    %p143 = scmp.eq.s32.totalorder %s13, 3
    %p144 = por %p142, %p143
    %p145 = scmp.ne.s32.totalorder %s137, %s140
    %p146 = scmp.eq.s32.totalorder %s13, 0
    %p147 = por %p145, %p146
    %p148 = scmp.ne.s32.totalorder %s137, %s140
    %p149 = scmp.eq.s32.totalorder %s18, 3
    %p150 = por %p148, %p149
    %p151 = scmp.ne.s32.totalorder %s140, %s141
    %p152 = scmp.eq.s32.totalorder %s18, 0
    %p153 = por %p151, %p152
    %p154 = scmp.ne.s32.totalorder %s140, %s141
    %p155 = scmp.eq.s32.totalorder %s19, 3
    %p156 = por %p154, %p155
    %p158 = scmp.ne.s32.totalorder %s141, %s157
    %p159 = scmp.eq.s32.totalorder %s19, 0
    %p160 = por %p158, %p159
    %s162 = sadd.s32 %s161, 1
    %p165 = scmp.eq.s32.totalorder %s13, 3
    %p166 = scmp.ne.s32.totalorder %s161, %s163
    %p167 = scmp.eq.s32.totalorder %s13, 0
    %p168 = por %p166, %p167
    %p169 = scmp.ne.s32.totalorder %s161, %s163
    %p170 = scmp.eq.s32.totalorder %s18, 3
    %p171 = por %p169, %p170
    %p172 = scmp.ne.s32.totalorder %s163, %s164
    %p173 = scmp.eq.s32.totalorder %s18, 0
    %p174 = por %p172, %p173
    %p175 = scmp.ne.s32.totalorder %s163, %s164
    %p176 = scmp.eq.s32.totalorder %s19, 3
    %p177 = por %p175, %p176
    %p179 = scmp.ne.s32.totalorder %s164, %s178
    %p180 = scmp.eq.s32.totalorder %s19, 0
    %p181 = por %p179, %p180
    %s183 = sadd.s32 %s182, 1
    %p186 = scmp.eq.s32.totalorder %s13, 3
    %p187 = scmp.ne.s32.totalorder %s182, %s184
    %p188 = scmp.eq.s32.totalorder %s13, 0
    %p189 = por %p187, %p188
    %p190 = scmp.ne.s32.totalorder %s182, %s184
    %p191 = scmp.eq.s32.totalorder %s18, 3
    %p192 = por %p190, %p191
    %p193 = scmp.ne.s32.totalorder %s184, %s185
    %p194 = scmp.eq.s32.totalorder %s18, 0
    %p195 = por %p193, %p194
    %p196 = scmp.ne.s32.totalorder %s184, %s185
    %p197 = scmp.eq.s32.totalorder %s19, 3
    %p198 = por %p196, %p197
    %p200 = scmp.ne.s32.totalorder %s185, %s199
    %p201 = scmp.eq.s32.totalorder %s19, 0
    %p202 = por %p200, %p201
    %s204 = sadd.s32 %s203, 1
    %p207 = scmp.eq.s32.totalorder %s13, 3
    %p208 = scmp.ne.s32.totalorder %s203, %s205
    %p209 = scmp.eq.s32.totalorder %s13, 0
    %p210 = por %p208, %p209
    %p211 = scmp.ne.s32.totalorder %s203, %s205
    %p212 = scmp.eq.s32.totalorder %s18, 3
    %p213 = por %p211, %p212
    %p214 = scmp.ne.s32.totalorder %s205, %s206
    %p215 = scmp.eq.s32.totalorder %s18, 0
    %p216 = por %p214, %p215
    %p217 = scmp.ne.s32.totalorder %s205, %s206
    %p218 = scmp.eq.s32.totalorder %s19, 3
    %p219 = por %p217, %p218
    %p221 = scmp.ne.s32.totalorder %s206, %s220
    %p222 = scmp.eq.s32.totalorder %s19, 0
    %p223 = por %p221, %p222
    %s224 = ssub.s32 %s20, %s32
    %s225 = ssub.s32 %s21, %s28
    %s226 = sor.u32 %s224, %s225
    %p227 = scmp.eq.s32.totalorder %s226, 0
    %s229 = sadd.s32 %s228, 1
    %s230 = scalar_select %p227, %s228, %s229
    %p233 = pneg %p227
    %p234 = scmp.eq.s32.totalorder %s13, 3
    %p235 = por %p233, %p234
    %p236 = scmp.ne.s32.totalorder %s228, %s231
    %p237 = scmp.eq.s32.totalorder %s13, 0
    %p238 = por %p236, %p237
    %p239 = scmp.ne.s32.totalorder %s228, %s231
    %p240 = scmp.eq.s32.totalorder %s18, 3
    %p241 = por %p239, %p240
    %p242 = scmp.ne.s32.totalorder %s231, %s232
    %p243 = scmp.eq.s32.totalorder %s18, 0
    %p244 = por %p242, %p243
    %p245 = scmp.ne.s32.totalorder %s231, %s232
    %p246 = scmp.eq.s32.totalorder %s19, 3
    %p247 = por %p245, %p246
    %p249 = scmp.ne.s32.totalorder %s232, %s248
    %p250 = scmp.eq.s32.totalorder %s19, 0
    %p251 = por %p249, %p250
    %p252 = scmp.le.s32.totalorder 1, %s13
    %p253 = scmp.lt.s32.totalorder %s13, 5
    %p254 = pnand %p252, %p253
    %p255 = pneg %p254
    // Predicated region
    $region9: #{encoder_forward.3} parent=5 // pred_check
      _
    $region10: #{encoder_forward.3} parent=5 // pred_check_branch
      %257 = sbr.rel (%p254) target = $region12
    $region11: #{encoder_forward.3} parent=5 // pred_region
      %s258 = ssub.s32 %s13, 1
      // Predicated region
      $region13: #{encoder_forward.3} parent=11 // pred_check
        %p259 = pneg %p174
      $region14: #{encoder_forward.3} parent=11 // pred_check_branch
        %261 = sbr.rel (%p259) target = $region16
      $region15: #{encoder_forward.3} parent=11 // pred_region
        _
      $region16: #{encoder_forward.3} parent=11 // pred_fallthru
        _
      // Predicated region
      $region17: #{encoder_forward.3} parent=11 // pred_check
        %p262 = pneg %p195
      $region18: #{encoder_forward.3} parent=11 // pred_check_branch
        %264 = sbr.rel (%p262) target = $region20
      $region19: #{encoder_forward.3} parent=11 // pred_region
        _
      $region20: #{encoder_forward.3} parent=11 // pred_fallthru
        _
      // Predicated region
      $region21: #{encoder_forward.3} parent=11 // pred_check
        %p265 = pneg %p216
      $region22: #{encoder_forward.3} parent=11 // pred_check_branch
        %267 = sbr.rel (%p265) target = $region24
      $region23: #{encoder_forward.3} parent=11 // pred_region
        _
      $region24: #{encoder_forward.3} parent=11 // pred_fallthru
        _
    $region12: #{encoder_forward.3} parent=5 // pred_fallthru
      _
    %p268 = scmp.lt.s32.totalorder %s13, 4
    // Predicated region
    $region25: #{encoder_forward.3} parent=5 // pred_check
      %p269 = pneg %p268
    $region26: #{encoder_forward.3} parent=5 // pred_check_branch
      %271 = sbr.rel (%p269) target = $region28
    $region27: #{encoder_forward.3} parent=5 // pred_region
      // Predicated region
      $region29: #{encoder_forward.3} parent=27 // pred_check
        %p272 = pneg %p47
      $region30: #{encoder_forward.3} parent=27 // pred_check_branch
        %274 = sbr.rel (%p272) target = $region32
      $region31: #{encoder_forward.3} parent=27 // pred_region
        %s275 = smul.u32 4, %s21
        %p276 = scmp.lt.s32.totalorder %s20, 1
        %s277 = scalar_select %p276, %s20, 1
        %p278 = scmp.lt.s32.totalorder %s275, 7
        %s279 = scalar_select %p278, %s275, 7
        %s280 = smul.addr %s277, 8
        %s281 = sadd.s32 %s279, %s280
        %s282 = smul.addr %s281, 4
        %s283 = scalar_lea.vmem %s0, %s282
        %s284 = smul.u32 4, %s21
      $region32: #{encoder_forward.3} parent=27 // pred_fallthru
        _
      // Predicated region
      $region33: #{encoder_forward.3} parent=27 // pred_check
        %p285 = pneg %p83
      $region34: #{encoder_forward.3} parent=27 // pred_check_branch
        %287 = sbr.rel (%p285) target = $region36
      $region35: #{encoder_forward.3} parent=27 // pred_region
        %s288 = smul.u32 %s21, 4
        %s289 = ssub.s32 %s288, 1
        %p290 = scmp.gt.s32.totalorder %s289, 0
        %s291 = scalar_select %p290, %s289, 0
        %p292 = scmp.lt.s32.totalorder %s20, 1
        %s293 = scalar_select %p292, %s20, 1
        %p294 = scmp.lt.s32.totalorder %s291, 7
        %s295 = scalar_select %p294, %s291, 7
        %s296 = smul.addr %s293, 8
        %s297 = sadd.s32 %s295, %s296
        %s298 = smul.addr %s297, 4
        %s299 = scalar_lea.vmem %s1, %s298
        %s300 = smul.u32 %s21, 4
        %s301 = ssub.s32 %s300, 1
        %p302 = scmp.gt.s32.totalorder %s301, 0
        %s303 = scalar_select %p302, %s301, 0
      $region36: #{encoder_forward.3} parent=27 // pred_fallthru
        _
      // Predicated region
      $region37: #{encoder_forward.3} parent=27 // pred_check
        %p304 = pneg %p119
      $region38: #{encoder_forward.3} parent=27 // pred_check_branch
        %306 = sbr.rel (%p304) target = $region40
      $region39: #{encoder_forward.3} parent=27 // pred_region
        %s307 = smul.u32 %s21, 4
        %s308 = sadd.s32 %s307, 4
        %p309 = scmp.lt.s32.totalorder %s308, 7
        %s310 = scalar_select %p309, %s308, 7
        %p311 = scmp.lt.s32.totalorder %s20, 1
        %s312 = scalar_select %p311, %s20, 1
        %p313 = scmp.lt.s32.totalorder %s310, 7
        %s314 = scalar_select %p313, %s310, 7
        %s315 = smul.addr %s312, 8
        %s316 = sadd.s32 %s314, %s315
        %s317 = smul.addr %s316, 4
        %s318 = scalar_lea.vmem %s2, %s317
        %s319 = smul.u32 %s21, 4
        %s320 = sadd.s32 %s319, 4
        %p321 = scmp.lt.s32.totalorder %s320, 7
        %s322 = scalar_select %p321, %s320, 7
      $region40: #{encoder_forward.3} parent=27 // pred_fallthru
        _
      // Predicated region
      $region41: #{encoder_forward.3} parent=27 // pred_check
        %p323 = pneg %p147
      $region42: #{encoder_forward.3} parent=27 // pred_check_branch
        %325 = sbr.rel (%p323) target = $region44
      $region43: #{encoder_forward.3} parent=27 // pred_region
        %s326 = smul.u32 4, %s21
        %p327 = scmp.lt.s32.totalorder %s20, 1
        %s328 = scalar_select %p327, %s20, 1
        %p329 = scmp.lt.s32.totalorder %s326, 7
        %s330 = scalar_select %p329, %s326, 7
        %s331 = smul.addr %s328, 8
        %s332 = sadd.s32 %s330, %s331
        %s333 = smul.addr %s332, 4
        %s334 = scalar_lea.vmem %s3, %s333
        %s335 = smul.u32 4, %s21
      $region44: #{encoder_forward.3} parent=27 // pred_fallthru
        _
    $region28: #{encoder_forward.3} parent=5 // pred_fallthru
      _
    %p336 = scmp.le.s32.totalorder 1, %s13
    %p337 = scmp.lt.s32.totalorder %s13, 5
    %p338 = pnand %p336, %p337
    %p339 = pneg %p338
    // Predicated region
    $region45: #{encoder_forward.3} parent=5 // pred_check
      _
    $region46: #{encoder_forward.3} parent=5 // pred_check_branch
      %341 = sbr.rel (%p338) target = $region48
    $region47: #{encoder_forward.3} parent=5 // pred_region
      %s342 = ssub.s32 %s13, 1
      %s343 = smul.u32 4, %s23
      %p344 = scmp.lt.s32.totalorder %s22, 1
      %s345 = scalar_select %p344, %s22, 1
      %p346 = scmp.lt.s32.totalorder %s343, 7
      %s347 = scalar_select %p346, %s343, 7
      %s348 = smul.addr %s345, 8
      %s349 = sadd.s32 %s347, %s348
      %s350 = smul.addr %s349, 4
      %s351 = scalar_lea.vmem %s0, %s350
      %p352 = pneg %p53
      %p353 = pneg %p50
      %s354 = smul.u32 %s23, 4
      %s355 = ssub.s32 %s354, 1
      %p356 = scmp.gt.s32.totalorder %s355, 0
      %s357 = scalar_select %p356, %s355, 0
      %p358 = scmp.lt.s32.totalorder %s22, 1
      %s359 = scalar_select %p358, %s22, 1
      %p360 = scmp.lt.s32.totalorder %s357, 7
      %s361 = scalar_select %p360, %s357, 7
      %s362 = smul.addr %s359, 8
      %s363 = sadd.s32 %s361, %s362
      %s364 = smul.addr %s363, 4
      %s365 = scalar_lea.vmem %s1, %s364
      %p366 = pneg %p89
      %p367 = pneg %p86
      %s368 = smul.u32 %s23, 4
      %s369 = sadd.s32 %s368, 4
      %p370 = scmp.lt.s32.totalorder %s369, 7
      %s371 = scalar_select %p370, %s369, 7
      %p372 = scmp.lt.s32.totalorder %s22, 1
      %s373 = scalar_select %p372, %s22, 1
      %p374 = scmp.lt.s32.totalorder %s371, 7
      %s375 = scalar_select %p374, %s371, 7
      %s376 = smul.addr %s373, 8
      %s377 = sadd.s32 %s375, %s376
      %s378 = smul.addr %s377, 4
      %s379 = scalar_lea.vmem %s2, %s378
      %p380 = pneg %p125
      %p381 = pneg %p122
      %s382 = smul.u32 4, %s23
      %p383 = scmp.lt.s32.totalorder %s22, 1
      %s384 = scalar_select %p383, %s22, 1
      %p385 = scmp.lt.s32.totalorder %s382, 7
      %s386 = scalar_select %p385, %s382, 7
      %s387 = smul.addr %s384, 8
      %s388 = sadd.s32 %s386, %s387
      %s389 = smul.addr %s388, 4
      %s390 = scalar_lea.vmem %s3, %s389
      %p391 = pneg %p153
      %p392 = pneg %p150
      %p393 = pneg %p174
      %p394 = pneg %p171
      %p395 = pneg %p195
      %p396 = pneg %p192
      %p397 = pneg %p216
      %p398 = pneg %p213
      %p399 = pneg %p244
      %p400 = pneg %p241
      %s401 = smul.u32 4, %s23
      %p402 = scmp.lt.s32.totalorder %s22, 1
      %s403 = scalar_select %p402, %s22, 1
      %p404 = scmp.lt.s32.totalorder %s401, 7
      %s405 = scalar_select %p404, %s401, 7
      %s406 = smul.addr %s403, 8
      %s407 = sadd.s32 %s405, %s406
      %s408 = smul.addr %s407, 8
      %s409 = scalar_lea.vmem %s7, %s408
      %s410 = smul.u32 4, %s23
      %p411 = scmp.lt.s32.totalorder %s22, 1
      %s412 = scalar_select %p411, %s22, 1
      %p413 = scmp.lt.s32.totalorder %s410, 7
      %s414 = scalar_select %p413, %s410, 7
      %s415 = smul.addr %s412, 8
      %s416 = sadd.s32 %s414, %s415
      %s417 = smul.addr %s416, 4
      %s418 = scalar_lea.vmem %s0, %s417
      %s419 = smul.u32 4, %s23
      %s420 = smul.u32 %s23, 4
      %s421 = ssub.s32 %s420, 1
      %p422 = scmp.gt.s32.totalorder %s421, 0
      %s423 = scalar_select %p422, %s421, 0
      %p424 = scmp.lt.s32.totalorder %s22, 1
      %s425 = scalar_select %p424, %s22, 1
      %p426 = scmp.lt.s32.totalorder %s423, 7
      %s427 = scalar_select %p426, %s423, 7
      %s428 = smul.addr %s425, 8
      %s429 = sadd.s32 %s427, %s428
      %s430 = smul.addr %s429, 4
      %s431 = scalar_lea.vmem %s1, %s430
      %s432 = smul.u32 %s23, 4
      %s433 = ssub.s32 %s432, 1
      %p434 = scmp.gt.s32.totalorder %s433, 0
      %s435 = scalar_select %p434, %s433, 0
      %s436 = smul.u32 %s23, 4
      %s437 = sadd.s32 %s436, 4
      %p438 = scmp.lt.s32.totalorder %s437, 7
      %s439 = scalar_select %p438, %s437, 7
      %p440 = scmp.lt.s32.totalorder %s22, 1
      %s441 = scalar_select %p440, %s22, 1
      %p442 = scmp.lt.s32.totalorder %s439, 7
      %s443 = scalar_select %p442, %s439, 7
      %s444 = smul.addr %s441, 8
      %s445 = sadd.s32 %s443, %s444
      %s446 = smul.addr %s445, 4
      %s447 = scalar_lea.vmem %s2, %s446
      %s448 = smul.u32 %s23, 4
      %s449 = sadd.s32 %s448, 4
      %p450 = scmp.lt.s32.totalorder %s449, 7
      %s451 = scalar_select %p450, %s449, 7
      %s452 = smul.u32 4, %s23
      %p453 = scmp.lt.s32.totalorder %s22, 1
      %s454 = scalar_select %p453, %s22, 1
      %p455 = scmp.lt.s32.totalorder %s452, 7
      %s456 = scalar_select %p455, %s452, 7
      %s457 = smul.addr %s454, 8
      %s458 = sadd.s32 %s456, %s457
      %s459 = smul.addr %s458, 4
      %s460 = scalar_lea.vmem %s3, %s459
      %s461 = smul.u32 4, %s23
      %s462 = smul.u32 4, %s23
      %p463 = scmp.lt.s32.totalorder %s22, 1
      %s464 = scalar_select %p463, %s22, 1
      %p465 = scmp.lt.s32.totalorder %s462, 7
      %s466 = scalar_select %p465, %s462, 7
      %s467 = smul.addr %s464, 8
      %s468 = sadd.s32 %s466, %s467
      %s469 = smul.addr %s468, 8
      %s470 = scalar_lea.vmem %s7, %s469
      %s471 = smul.u32 4, %s23
      %v473 = vld [vmem:[%s4] sm:$0x1]
      %v474 = vld [vmem:[%s418] sm:$0xf]
      %v475 = vld [vmem:[%s418 + $0x4] sm:$0xf]
      %v476 = vld [vmem:[%s418 + $0x8] sm:$0xf]
      %v477 = vld [vmem:[%s418 + $0xc] sm:$0xf]
      %v478 = vunpack.c.l.bf16 %v474
      %v479 = vunpack.c.l.bf16 %v475
      %v480 = vunpack.c.l.bf16 %v476
      %v481 = vunpack.c.l.bf16 %v477
      %v483 = vlaneseq
      %v484 = vshrl.u32 %v483, 7
      %v485 = vsub.s32 0, %v484
      %v486 = vrot.slane %v473, %v485
      %v488 = vadd.f32 %v478, %v486
      %v489 = vadd.f32 %v479, %v486
      %v490 = vadd.f32 %v480, %v486
      %v491 = vadd.f32 %v481, %v486
      %v492 = vpack.c.bf16 %v488, %v488
      %v493 = vpack.c.bf16 %v489, %v489
      %v494 = vpack.c.bf16 %v490, %v490
      %v495 = vpack.c.bf16 %v491, %v491
      %v496 = vld [vmem:[%s431] sm:$0xf]
      %v497 = vunpack.c.l.bf16 %v496
      %v498 = vadd.f32 %v497, %v486
      %v499 = vld [vmem:[%s447] sm:$0xf]
      %v500 = vunpack.c.l.bf16 %v499
      %v501 = vadd.f32 %v500, %v486
      %p502 = scmp.eq.s32.totalorder %s23, 0
      %s503 = scalar_select %p502, 1, 0
      %v504 = vstv %s503
      %vm505 = vcmp.eq.s32.totalorder %v504, 1
      %v506 = vsel %vm505, 0.0, %v498
      %v507 = vpack.c.bf16 %v506, %v506
      %p508 = scmp.eq.s32.totalorder %s23, 1
      %s509 = scalar_select %p508, 1, 0
      %v510 = vstv %s509
      %vm511 = vcmp.eq.s32.totalorder %v510, 1
      %v512 = vsel %vm511, 0.0, %v501
      %v513 = vpack.c.bf16 %v512, %v512
      %v515 = vshrl.u32 %v507, 16
      %v517 = vrot.slane %v515, 7
      %v518 = vshll.u32 %v507, 16
      %v520 = vor.u32 %v517, %v518
      %v522 = vshrl.u32 %v492, 16
      %v524 = vrot.slane %v522, 7
      %v525 = vshll.u32 %v492, 16
      %v527 = vor.u32 %v524, %v525
      %v529 = vshrl.u32 %v493, 16
      %v531 = vrot.slane %v529, 7
      %v532 = vshll.u32 %v493, 16
      %v534 = vor.u32 %v531, %v532
      %v536 = vshrl.u32 %v494, 16
      %v538 = vrot.slane %v536, 7
      %v539 = vshll.u32 %v494, 16
      %v541 = vor.u32 %v538, %v539
      %v543 = vshrl.u32 %v495, 16
      %v545 = vrot.slane %v543, 7
      %v546 = vshll.u32 %v495, 16
      %v548 = vor.u32 %v545, %v546
      %v550 = vshrl.u32 %v513, 16
      %v552 = vrot.slane %v550, 7
      %v553 = vshll.u32 %v513, 16
      %v555 = vor.u32 %v552, %v553
      %vm562 = vcmask 1040384
      %vm563 = vsmask.f32 256
      %vm564 = vmand %vm562, %vm563
      %v565 = vsel %vm564, 0, %v520
      %v566 = vsel %vm564, 0, %v527
      %v567 = vsel %vm564, 0, %v534
      %v568 = vsel %vm564, 0, %v541
      %v569 = vsel %vm564, 0, %v548
      %v570 = vsel %vm564, 0, %v555
      %v571 = vrot.slane %v518, 1
      %v572 = vor.u32 %v515, %v571
      %v573 = vrot.slane %v525, 1
      %v574 = vor.u32 %v522, %v573
      %v575 = vrot.slane %v532, 1
      %v576 = vor.u32 %v529, %v575
      %v577 = vrot.slane %v539, 1
      %v578 = vor.u32 %v536, %v577
      %v579 = vrot.slane %v546, 1
      %v580 = vor.u32 %v543, %v579
      %v581 = vrot.slane %v553, 1
      %v582 = vor.u32 %v550, %v581
      %vm589 = vcmask 1043456
      %vm590 = vsmask.f32 3328
      %vm591 = vmand %vm589, %vm590
      %v592 = vsel %vm591, %v572, 0
      %v593 = vsel %vm591, %v574, 0
      %v594 = vsel %vm591, %v576, 0
      %v595 = vsel %vm591, %v578, 0
      %v596 = vsel %vm591, %v580, 0
      %v597 = vsel %vm591, %v582, 0
      %604 = vrot.lane.b32.xlu0 %v507, 8
      %v605 = vpop.permute.xlu0 %604
      %606 = vrot.lane.b32.xlu0 %v492, 8
      %v607 = vpop.permute.xlu0 %606
      %608 = vrot.lane.b32.xlu0 %v493, 8
      %v609 = vpop.permute.xlu0 %608
      %610 = vrot.lane.b32.xlu0 %v494, 8
      %v611 = vpop.permute.xlu0 %610
      %612 = vrot.lane.b32.xlu0 %v495, 8
      %v613 = vpop.permute.xlu0 %612
      %614 = vrot.lane.b32.xlu0 %v513, 8
      %v615 = vpop.permute.xlu0 %614
      %622 = vrot.lane.b32.xlu0 %v592, 16
      %v623 = vpop.permute.xlu0 %622
      %624 = vrot.lane.b32.xlu0 %v593, 16
      %v625 = vpop.permute.xlu0 %624
      %626 = vrot.lane.b32.xlu0 %v594, 16
      %v627 = vpop.permute.xlu0 %626
      %628 = vrot.lane.b32.xlu0 %v595, 16
      %v629 = vpop.permute.xlu0 %628
      %630 = vrot.lane.b32.xlu0 %v596, 16
      %v631 = vpop.permute.xlu0 %630
      %632 = vrot.lane.b32.xlu0 %v597, 16
      %v633 = vpop.permute.xlu0 %632
      %vm634 = vcmask 64512
      %v637 = vsel %vm634, %v565, %v605
      %v640 = vsel %vm634, %v566, %v607
      %v643 = vsel %vm634, %v567, %v609
      %v646 = vsel %vm634, %v568, %v611
      %v649 = vsel %vm634, %v569, %v613
      %v652 = vsel %vm634, %v570, %v615
      %vm653 = vcmask 130048
      %v655 = vsel %vm653, %v637, %v623
      %v657 = vsel %vm653, %v640, %v625
      %v659 = vsel %vm653, %v643, %v627
      %v661 = vsel %vm653, %v646, %v629
      %v663 = vsel %vm653, %v649, %v631
      %v665 = vsel %vm653, %v652, %v633
      %670 = vrot.lane.b32.xlu0 %v657, 24
      %v671 = vpop.permute.xlu0 %670
      %672 = vrot.lane.b32.xlu0 %v659, 24
      %v673 = vpop.permute.xlu0 %672
      %674 = vrot.lane.b32.xlu0 %v661, 24
      %v675 = vpop.permute.xlu0 %674
      %676 = vrot.lane.b32.xlu0 %v663, 24
      %v677 = vpop.permute.xlu0 %676
      %679 = vrot.lane.b32.xlu0 %v659, 48
      %v680 = vpop.permute.xlu0 %679
      %681 = vrot.lane.b32.xlu0 %v661, 48
      %v682 = vpop.permute.xlu0 %681
      %683 = vrot.lane.b32.xlu0 %v663, 48
      %v684 = vpop.permute.xlu0 %683
      %685 = vrot.lane.b32.xlu0 %v665, 48
      %v686 = vpop.permute.xlu0 %685
      %vm687 = vcmask 195584
      %v689 = vsel %vm687, %v655, %v671
      %v691 = vsel %vm687, %v657, %v673
      %v693 = vsel %vm687, %v659, %v675
      %v695 = vsel %vm687, %v661, %v677
      %vm696 = vcmask 392192
      %v698 = vsel %vm696, %v689, %v680
      %v700 = vsel %vm696, %v691, %v682
      %v702 = vsel %vm696, %v693, %v684
      %v704 = vsel %vm696, %v695, %v686
      %v705 = vld [vmem:[%s460] sm:$0xf]
      %v706 = vld [vmem:[%s460 + $0x4] sm:$0xf]
      %v707 = vld [vmem:[%s460 + $0x8] sm:$0xf]
      %v708 = vld [vmem:[%s460 + $0xc] sm:$0xf]
      %v709 = vld [vmem:[%s6] sm:$0x3]
      %v710 = vld [vmem:[%s5] sm:$0xf]
      %v711 = vld [vmem:[%s5 + $0x4] sm:$0xf]
      %v712 = vld [vmem:[%s5 + $0x8] sm:$0xf]
      %v713 = vld [vmem:[%s5 + $0xc] sm:$0xf]
      %v714 = vld [vmem:[%s5 + $0x10] sm:$0xf]
      %v715 = vld [vmem:[%s5 + $0x14] sm:$0xf]
      %v716 = vld [vmem:[%s5 + $0x18] sm:$0xf]
      %v717 = vld [vmem:[%s5 + $0x1c] sm:$0xf]
      %v718 = vld [vmem:[%s5 + $0x20] sm:$0xf]
      %v723 = vunpack.c.l.b16 %v698
      %v724 = vunpack.c.l.b16 %v700
      %v725 = vunpack.c.l.b16 %v702
      %v726 = vunpack.c.l.b16 %v704
      %v727 = vpack.c.b16 %v724, %v723
      %v728 = vpack.c.b16 %v726, %v725
      %v738 = vunpack.c.l.b16 %v710
      %v739 = vunpack.c.l.b16 %v711
      %v740 = vunpack.c.l.b16 %v712
      %v741 = vunpack.c.l.b16 %v713
      %v742 = vunpack.c.l.b16 %v714
      %v743 = vunpack.c.l.b16 %v715
      %v744 = vunpack.c.l.b16 %v716
      %v745 = vunpack.c.l.b16 %v717
      %v746 = vunpack.c.l.b16 %v718
      %v747 = vpack.c.b16 %v739, %v738
      %v748 = vpack.c.b16 %v741, %v740
      %v749 = vpack.c.b16 %v743, %v742
      %v750 = vpack.c.b16 %v745, %v744
      %v751 = vpack.c.b16 %v746, %v746
      %vm756 = vcmask 588800
      %v758 = vsel %vm756, %v727, 0
      %v761 = vsel %vm756, %v728, 0
      %vm763 = vcmask 1043456
      %v765 = vsel %vm763, %v751, 0
      %767 = vmatprep.subr.bf16.mxu0 0
      %768 = vmatpush1.bf16.msra.mxu0 0
      %769 = vmatprep.subr.bf16.mxu0 0
      %770 = vmatpush1.bf16.msra.mxu0 0
      %771 = vmatprep.subr.bf16.mxu0 0
      %772 = vmatpush1.bf16.msra.mxu0 0
      %773 = vmatprep.subr.bf16.mxu0 0
      %774 = vmatpush1.bf16.msra.mxu0 %v765
      %775 = vmatprep.subr.bf16.mxu0 0
      %776 = vmatpush1.bf16.msra.mxu0 %v750
      %777 = vmatprep.subr.bf16.mxu0 0
      %778 = vmatpush1.bf16.msra.mxu0 %v749
      %779 = vmatprep.subr.bf16.mxu0 0
      %780 = vmatpush1.bf16.msra.mxu0 %v748
      %781 = vmatprep.subr.bf16.mxu0 0
      %782 = vmatpush1.bf16.msra.mxu0 %v747
      %783 = vmatprep.subr.bf16.mxu0 0
      %784 = vmatpush2.bf16.msra.mxu0 0
      %785 = vmatprep.subr.bf16.mxu0 0
      %786 = vmatpush2.bf16.msra.mxu0 0
      %787 = vmatprep.subr.bf16.mxu0 0
      %788 = vmatpush2.bf16.msra.mxu0 0
      %789 = vmatprep.subr.bf16.mxu0 0
      %790 = vmatpush2.bf16.msra.mxu0 0
      %791 = vmatprep.subr.bf16.mxu0 0
      %792 = vmatpush2.bf16.msra.mxu0 0
      %793 = vmatprep.subr.bf16.mxu0 0
      %794 = vmatpush2.bf16.msra.mxu0 0
      %795 = vmatprep.subr.bf16.mxu0 0
      %796 = vmatpush2.bf16.msra.mxu0 0
      %797 = vmatprep.subr.bf16.mxu0 0
      %798 = vmatpush2.bf16.msra.mxu0 0
      %799 = vmatprep.mubr.bf16.mxu0 0
      %800 = vmatmul.mubr.bf16.gmra.mxu0 %v758
      %v801 = vpop.f32.mrf.mxu0
      %v802 = vadd.f32 0.0, %v801
      %v803 = vpop.f32.mrf.mxu0
      %v804 = vpop.f32.mrf.mxu0
      %v805 = vadd.f32 0.0, %v804
      %v806 = vpop.f32.mrf.mxu0
      %807 = vmatprep.mubr.bf16.mxu0 0
      %808 = vmatmul.mubr.bf16.gmra.mxu0 %v761
      %v809 = vpop.f32.mrf.mxu0
      %v810 = vadd.f32 0.0, %v809
      %v811 = vpop.f32.mrf.mxu0
      %v812 = vpop.f32.mrf.mxu0
      %v813 = vadd.f32 0.0, %v812
      %v814 = vpop.f32.mrf.mxu0
      %815 = vdwg.mxu0
      %v820 = vunpack.c.l.b16 %v705
      %v821 = vunpack.c.l.b16 %v706
      %v822 = vunpack.c.l.b16 %v707
      %v823 = vunpack.c.l.b16 %v708
      %v824 = vpack.c.b16 %v821, %v820
      %v825 = vpack.c.b16 %v823, %v822
      %vm826 = vcmask 31744
      %v828 = vsel %vm826, %v824, 0
      %v831 = vsel %vm826, %v825, 0
      %vm833 = vcmask 1041408
      %v835 = vsel %vm833, %v709, 0
      %837 = vmatprep.subr.bf16.mxu0 0
      %838 = vmatpush1.bf16.msra.mxu0 0
      %839 = vmatprep.subr.bf16.mxu0 0
      %840 = vmatpush1.bf16.msra.mxu0 0
      %841 = vmatprep.subr.bf16.mxu0 0
      %842 = vmatpush1.bf16.msra.mxu0 0
      %843 = vmatprep.subr.bf16.mxu0 0
      %844 = vmatpush1.bf16.msra.mxu0 0
      %845 = vmatprep.subr.bf16.mxu0 0
      %846 = vmatpush1.bf16.msra.mxu0 0
      %847 = vmatprep.subr.bf16.mxu0 0
      %848 = vmatpush1.bf16.msra.mxu0 0
      %849 = vmatprep.subr.bf16.mxu0 0
      %850 = vmatpush1.bf16.msra.mxu0 0
      %851 = vmatprep.subr.bf16.mxu0 0
      %852 = vmatpush1.bf16.msra.mxu0 %v835
      %853 = vmatprep.subr.bf16.mxu0 0
      %854 = vmatpush2.bf16.msra.mxu0 0
      %855 = vmatprep.subr.bf16.mxu0 0
      %856 = vmatpush2.bf16.msra.mxu0 0
      %857 = vmatprep.subr.bf16.mxu0 0
      %858 = vmatpush2.bf16.msra.mxu0 0
      %859 = vmatprep.subr.bf16.mxu0 0
      %860 = vmatpush2.bf16.msra.mxu0 0
      %861 = vmatprep.subr.bf16.mxu0 0
      %862 = vmatpush2.bf16.msra.mxu0 0
      %863 = vmatprep.subr.bf16.mxu0 0
      %864 = vmatpush2.bf16.msra.mxu0 0
      %865 = vmatprep.subr.bf16.mxu0 0
      %866 = vmatpush2.bf16.msra.mxu0 0
      %867 = vmatprep.subr.bf16.mxu0 0
      %868 = vmatpush2.bf16.msra.mxu0 0
      %869 = vmatprep.mubr.bf16.mxu0 0
      %870 = vmatmul.mubr.bf16.gmra.mxu0 %v828
      %v871 = vpop.f32.mrf.mxu0
      %v872 = vadd.f32 %v802, %v871
      %v873 = vpop.f32.mrf.mxu0
      %v874 = vpop.f32.mrf.mxu0
      %v875 = vadd.f32 %v805, %v874
      %v876 = vpop.f32.mrf.mxu0
      %877 = vmatprep.mubr.bf16.mxu0 0
      %878 = vmatmul.mubr.bf16.gmra.mxu0 %v831
      %v879 = vpop.f32.mrf.mxu0
      %v880 = vadd.f32 %v810, %v879
      %v881 = vpop.f32.mrf.mxu0
      %v882 = vpop.f32.mrf.mxu0
      %v883 = vadd.f32 %v813, %v882
      %v884 = vpop.f32.mrf.mxu0
      %885 = vdwg.mxu0
      %v886 = vmax.f32 %v872, 0.0
      %v887 = vmax.f32 %v875, 0.0
      %v888 = vmax.f32 %v880, 0.0
      %v889 = vmax.f32 %v883, 0.0
      %890 = vst.msk [vmem:[%s470] sm:$0xff] %vm634, %v886
      %891 = vst.msk [vmem:[%s470 + $0x8] sm:$0xff] %vm634, %v887
      %892 = vst.msk [vmem:[%s470 + $0x10] sm:$0xff] %vm634, %v888
      %893 = vst.msk [vmem:[%s470 + $0x18] sm:$0xff] %vm634, %v889
      %s894 = smul.u32 4, %s23
      %p895 = scmp.lt.s32.totalorder %s22, 1
      %s896 = scalar_select %p895, %s22, 1
      %p897 = scmp.lt.s32.totalorder %s894, 7
      %s898 = scalar_select %p897, %s894, 7
      %s899 = smul.addr %s896, 8
      %s900 = sadd.s32 %s898, %s899
      %s901 = smul.addr %s900, 8
      %s902 = scalar_lea.vmem %s7, %s901
      // Predicated region
      $region49: #{encoder_forward.3} parent=47 // pred_check
        %p903 = pneg %p241
      $region50: #{encoder_forward.3} parent=47 // pred_check_branch
        %905 = sbr.rel (%p903) target = $region52
      $region51: #{encoder_forward.3} parent=47 // pred_region
        %s906 = smul.u32 4, %s23
      $region52: #{encoder_forward.3} parent=47 // pred_fallthru
        _
    $region48: #{encoder_forward.3} parent=5 // pred_fallthru
      _
    %p907 = scmp.le.s32.totalorder 2, %s13
    // Predicated region
    $region53: #{encoder_forward.3} parent=5 // pred_check
      %p908 = pneg %p907
    $region54: #{encoder_forward.3} parent=5 // pred_check_branch
      %910 = sbr.rel (%p908) target = $region56
    $region55: #{encoder_forward.3} parent=5 // pred_region
      %s911 = ssub.s32 %s13, 2
      // Predicated region
      $region57: #{encoder_forward.3} parent=55 // pred_check
        %p912 = pneg %p247
      $region58: #{encoder_forward.3} parent=55 // pred_check_branch
        %914 = sbr.rel (%p912) target = $region60
      $region59: #{encoder_forward.3} parent=55 // pred_region
        %s915 = smul.u32 4, %s25
        %p916 = scmp.lt.s32.totalorder %s24, 1
        %s917 = scalar_select %p916, %s24, 1
        %p918 = scmp.lt.s32.totalorder %s915, 7
        %s919 = scalar_select %p918, %s915, 7
        %s920 = smul.addr %s917, 8
        %s921 = sadd.s32 %s919, %s920
        %s922 = smul.addr %s921, 8
        %s923 = scalar_lea.vmem %s7, %s922
      $region60: #{encoder_forward.3} parent=55 // pred_fallthru
        _
    $region56: #{encoder_forward.3} parent=5 // pred_fallthru
      _
  $region6: #{encoder_forward.3} parent=0 // loop_footer
    %s17 = sadd.s32 1, %s13
  $region7: #{encoder_forward.3} parent=0 // loop_footer_branch
    %12 = sbr.rel target = $region3
  $region8: #{encoder_forward.3} parent=0 // loop_exit
    _

// kernel: encoder_forward.2
$region0: #{encoder_forward.2}
  #allocation0 [shape = 'u32[]', space=smem, size = 0x4, offset = 0x4, fixed_abs, tag = 'smem constant byte address 0x4 - core index']
  #allocation1 [shape = 'u32[144,128]{1,0:T(1,128)}', space=vmem, size = 0x12000, scoped, tag = 'internal scratch']
  %s0 = inlined_call_operand.vmem [shape: bf16[2,8,8,16], index: 0, kind: input, shape index: {}, may-alias: {0,1,2}]
  %s1 = inlined_call_operand.vmem [shape: bf16[2,8,8,16], index: 1, kind: input, shape index: {}, may-alias: {0,1,2}]
  %s2 = inlined_call_operand.vmem [shape: bf16[2,8,8,16], index: 2, kind: input, shape index: {}, may-alias: {0,1,2}]
  %s3 = inlined_call_operand.vmem [shape: f32[4,1,4], index: 3, kind: input, shape index: {}]
  %s4 = inlined_call_operand.vmem [shape: bf16[36,8], index: 4, kind: input, shape index: {}]
  %s5 = inlined_call_operand.vmem [shape: bf16[2,8,8,4], index: 5, kind: output, shape index: {0}]
  %s6 = inlined_call_operand.vmem [shape: bf16[2,8,8,8], index: 6, kind: output, shape index: {1}]
  %s7 = inlined_call_operand.vmem [shape: f32[2,2,1,8], index: 7, kind: output, shape index: {2}]
  %s8 = inlined_call_operand.vmem [shape: f32[2,2,1,8], index: 8, kind: output, shape index: {3}]
  %9 = xla_tuple %s5, %s6, %s7, %s8
  %s10 = sld [smem:[#allocation0]]
  $region77: #{encoder_forward.2} parent=0
    _
  %s12 = ssub.s32 1, %s10
  %s13 = scalar_select 0, %s12, %s10
  loop: start=0, step=1, limit=6
  $region2: #{encoder_forward.2} parent=0 // loop_pre_header
    _
  $region3: #{encoder_forward.2} parent=0 // loop_header
    %s15 = sphi 0, %s19
    %p16 = scmp.ge.s32.totalorder %s15, 6
    %s22 = sphi 0, %s34
    %s23 = sphi 0, %s30
    %s24 = sphi 0, %s22
    %s25 = sphi 0, %s23
    %s26 = sphi 0, %s24
    %s27 = sphi 0, %s25
    %s39 = sphi 0, %s41
    %s42 = sphi 0, %s39
    %s43 = sphi 0, %s42
    %s59 = sphi 0, %s43
    %s75 = sphi 0, %s77
    %s78 = sphi 0, %s75
    %s79 = sphi 0, %s78
    %s95 = sphi 0, %s79
    %s111 = sphi 0, %s113
    %s114 = sphi 0, %s111
    %s115 = sphi 0, %s114
    %s131 = sphi 0, %s115
    %s135 = sphi 0, %s135
    %s137 = sphi 0, %s135
    %s138 = sphi 0, %s137
    %s152 = sphi 0, %s138
    %s156 = sphi 0, %s156
    %s158 = sphi 0, %s156
    %s159 = sphi 0, %s158
    %s173 = sphi 0, %s159
    %s181 = sphi 0, %s183
    %s184 = sphi 0, %s181
    %s185 = sphi 0, %s184
    %s201 = sphi 0, %s185
    %s209 = sphi 0, %s211
    %s212 = sphi 0, %s209
    %s213 = sphi 0, %s212
    %s229 = sphi 0, %s213
    %s237 = sphi 0, %s239
    %s240 = sphi 0, %s237
    %s241 = sphi 0, %s240
    %s257 = sphi 0, %s241
    %s265 = sphi 0, %s267
    %s268 = sphi 0, %s265
    %s269 = sphi 0, %s268
    %s285 = sphi 0, %s269
  $region4: #{encoder_forward.2} parent=0 // loop_header_branch
    %18 = sbr.rel (%p16) target = $region8
  $region5: #{encoder_forward.2} parent=0 // loop_body
    %s20 = ssub.s32 %s15, 1
    %s21 = ssub.s32 %s15, 2
    %s28 = sadd.s32 1, %s23
    %p29 = scmp.ge.s32.totalorder %s28, 2
    %s30 = scalar_select %p29, 0, %s28
    %s31 = sadd.s32 1, %s22
    %s32 = scalar_select %p29, %s31, %s22
    %p33 = scmp.ge.s32.totalorder %s32, 2
    %s34 = scalar_select %p33, 0, %s32
    %s35 = ssub.s32 %s22, %s34
    %s36 = ssub.s32 %s23, %s30
    %s37 = sor.u32 %s35, %s36
    %p38 = scmp.eq.s32.totalorder %s37, 0
    %s40 = sadd.s32 %s39, 1
    %s41 = scalar_select %p38, %s39, %s40
    %p44 = pneg %p38
    %p45 = scmp.eq.s32.totalorder %s15, 3
    %p46 = por %p44, %p45
    %p47 = scmp.ne.s32.totalorder %s39, %s42
    %p48 = scmp.eq.s32.totalorder %s15, 0
    %p49 = por %p47, %p48
    %p50 = scmp.ne.s32.totalorder %s39, %s42
    %p51 = scmp.eq.s32.totalorder %s20, 3
    %p52 = por %p50, %p51
    %p53 = scmp.ne.s32.totalorder %s42, %s43
    %p54 = scmp.eq.s32.totalorder %s20, 0
    %p55 = por %p53, %p54
    %p56 = scmp.ne.s32.totalorder %s42, %s43
    %p57 = scmp.eq.s32.totalorder %s21, 3
    %p58 = por %p56, %p57
    %p60 = scmp.ne.s32.totalorder %s43, %s59
    %p61 = scmp.eq.s32.totalorder %s21, 0
    %p62 = por %p60, %p61
    %s63 = smul.u32 %s23, 4
    %s64 = ssub.s32 %s63, 1
    %p65 = scmp.gt.s32.totalorder %s64, 0
    %s66 = scalar_select %p65, %s64, 0
    %s67 = smul.u32 %s30, 4
    %s68 = ssub.s32 %s67, 1
    %p69 = scmp.gt.s32.totalorder %s68, 0
    %s70 = scalar_select %p69, %s68, 0
    %s71 = ssub.s32 %s22, %s34
    %s72 = ssub.s32 %s66, %s70
    %s73 = sor.u32 %s71, %s72
    %p74 = scmp.eq.s32.totalorder %s73, 0
    %s76 = sadd.s32 %s75, 1
    %s77 = scalar_select %p74, %s75, %s76
    %p80 = pneg %p74
    %p81 = scmp.eq.s32.totalorder %s15, 3
    %p82 = por %p80, %p81
    %p83 = scmp.ne.s32.totalorder %s75, %s78
    %p84 = scmp.eq.s32.totalorder %s15, 0
    %p85 = por %p83, %p84
    %p86 = scmp.ne.s32.totalorder %s75, %s78
    %p87 = scmp.eq.s32.totalorder %s20, 3
    %p88 = por %p86, %p87
    %p89 = scmp.ne.s32.totalorder %s78, %s79
    %p90 = scmp.eq.s32.totalorder %s20, 0
    %p91 = por %p89, %p90
    %p92 = scmp.ne.s32.totalorder %s78, %s79
    %p93 = scmp.eq.s32.totalorder %s21, 3
    %p94 = por %p92, %p93
    %p96 = scmp.ne.s32.totalorder %s79, %s95
    %p97 = scmp.eq.s32.totalorder %s21, 0
    %p98 = por %p96, %p97
    %s99 = smul.u32 %s23, 4
    %s100 = sadd.s32 %s99, 4
    %p101 = scmp.lt.s32.totalorder %s100, 7
    %s102 = scalar_select %p101, %s100, 7
    %s103 = smul.u32 %s30, 4
    %s104 = sadd.s32 %s103, 4
    %p105 = scmp.lt.s32.totalorder %s104, 7
    %s106 = scalar_select %p105, %s104, 7
    %s107 = ssub.s32 %s22, %s34
    %s108 = ssub.s32 %s102, %s106
    %s109 = sor.u32 %s107, %s108
    %p110 = scmp.eq.s32.totalorder %s109, 0
    %s112 = sadd.s32 %s111, 1
    %s113 = scalar_select %p110, %s111, %s112
    %p116 = pneg %p110
    %p117 = scmp.eq.s32.totalorder %s15, 3
    %p118 = por %p116, %p117
    %p119 = scmp.ne.s32.totalorder %s111, %s114
    %p120 = scmp.eq.s32.totalorder %s15, 0
    %p121 = por %p119, %p120
    %p122 = scmp.ne.s32.totalorder %s111, %s114
    %p123 = scmp.eq.s32.totalorder %s20, 3
    %p124 = por %p122, %p123
    %p125 = scmp.ne.s32.totalorder %s114, %s115
    %p126 = scmp.eq.s32.totalorder %s20, 0
    %p127 = por %p125, %p126
    %p128 = scmp.ne.s32.totalorder %s114, %s115
    %p129 = scmp.eq.s32.totalorder %s21, 3
    %p130 = por %p128, %p129
    %p132 = scmp.ne.s32.totalorder %s115, %s131
    %p133 = scmp.eq.s32.totalorder %s21, 0
    %p134 = por %p132, %p133
    %s136 = sadd.s32 %s135, 1
    %p139 = scmp.eq.s32.totalorder %s15, 3
    %p140 = scmp.ne.s32.totalorder %s135, %s137
    %p141 = scmp.eq.s32.totalorder %s15, 0
    %p142 = por %p140, %p141
    %p143 = scmp.ne.s32.totalorder %s135, %s137
    %p144 = scmp.eq.s32.totalorder %s20, 3
    %p145 = por %p143, %p144
    %p146 = scmp.ne.s32.totalorder %s137, %s138
    %p147 = scmp.eq.s32.totalorder %s20, 0
    %p148 = por %p146, %p147
    %p149 = scmp.ne.s32.totalorder %s137, %s138
    %p150 = scmp.eq.s32.totalorder %s21, 3
    %p151 = por %p149, %p150
    %p153 = scmp.ne.s32.totalorder %s138, %s152
    %p154 = scmp.eq.s32.totalorder %s21, 0
    %p155 = por %p153, %p154
    %s157 = sadd.s32 %s156, 1
    %p160 = scmp.eq.s32.totalorder %s15, 3
    %p161 = scmp.ne.s32.totalorder %s156, %s158
    %p162 = scmp.eq.s32.totalorder %s15, 0
    %p163 = por %p161, %p162
    %p164 = scmp.ne.s32.totalorder %s156, %s158
    %p165 = scmp.eq.s32.totalorder %s20, 3
    %p166 = por %p164, %p165
    %p167 = scmp.ne.s32.totalorder %s158, %s159
    %p168 = scmp.eq.s32.totalorder %s20, 0
    %p169 = por %p167, %p168
    %p170 = scmp.ne.s32.totalorder %s158, %s159
    %p171 = scmp.eq.s32.totalorder %s21, 3
    %p172 = por %p170, %p171
    %p174 = scmp.ne.s32.totalorder %s159, %s173
    %p175 = scmp.eq.s32.totalorder %s21, 0
    %p176 = por %p174, %p175
    %s177 = ssub.s32 %s22, %s34
    %s178 = ssub.s32 %s23, %s30
    %s179 = sor.u32 %s177, %s178
    %p180 = scmp.eq.s32.totalorder %s179, 0
    %s182 = sadd.s32 %s181, 1
    %s183 = scalar_select %p180, %s181, %s182
    %p186 = pneg %p180
    %p187 = scmp.eq.s32.totalorder %s15, 3
    %p188 = por %p186, %p187
    %p189 = scmp.ne.s32.totalorder %s181, %s184
    %p190 = scmp.eq.s32.totalorder %s15, 0
    %p191 = por %p189, %p190
    %p192 = scmp.ne.s32.totalorder %s181, %s184
    %p193 = scmp.eq.s32.totalorder %s20, 3
    %p194 = por %p192, %p193
    %p195 = scmp.ne.s32.totalorder %s184, %s185
    %p196 = scmp.eq.s32.totalorder %s20, 0
    %p197 = por %p195, %p196
    %p198 = scmp.ne.s32.totalorder %s184, %s185
    %p199 = scmp.eq.s32.totalorder %s21, 3
    %p200 = por %p198, %p199
    %p202 = scmp.ne.s32.totalorder %s185, %s201
    %p203 = scmp.eq.s32.totalorder %s21, 0
    %p204 = por %p202, %p203
    %s205 = ssub.s32 %s22, %s34
    %s206 = ssub.s32 %s23, %s30
    %s207 = sor.u32 %s205, %s206
    %p208 = scmp.eq.s32.totalorder %s207, 0
    %s210 = sadd.s32 %s209, 1
    %s211 = scalar_select %p208, %s209, %s210
    %p214 = pneg %p208
    %p215 = scmp.eq.s32.totalorder %s15, 3
    %p216 = por %p214, %p215
    %p217 = scmp.ne.s32.totalorder %s209, %s212
    %p218 = scmp.eq.s32.totalorder %s15, 0
    %p219 = por %p217, %p218
    %p220 = scmp.ne.s32.totalorder %s209, %s212
    %p221 = scmp.eq.s32.totalorder %s20, 3
    %p222 = por %p220, %p221
    %p223 = scmp.ne.s32.totalorder %s212, %s213
    %p224 = scmp.eq.s32.totalorder %s20, 0
    %p225 = por %p223, %p224
    %p226 = scmp.ne.s32.totalorder %s212, %s213
    %p227 = scmp.eq.s32.totalorder %s21, 3
    %p228 = por %p226, %p227
    %p230 = scmp.ne.s32.totalorder %s213, %s229
    %p231 = scmp.eq.s32.totalorder %s21, 0
    %p232 = por %p230, %p231
    %s233 = ssub.s32 %s22, %s34
    %s234 = ssub.s32 %s23, %s30
    %s235 = sor.u32 %s233, %s234
    %p236 = scmp.eq.s32.totalorder %s235, 0
    %s238 = sadd.s32 %s237, 1
    %s239 = scalar_select %p236, %s237, %s238
    %p242 = pneg %p236
    %p243 = scmp.eq.s32.totalorder %s15, 3
    %p244 = por %p242, %p243
    %p245 = scmp.ne.s32.totalorder %s237, %s240
    %p246 = scmp.eq.s32.totalorder %s15, 0
    %p247 = por %p245, %p246
    %p248 = scmp.ne.s32.totalorder %s237, %s240
    %p249 = scmp.eq.s32.totalorder %s20, 3
    %p250 = por %p248, %p249
    %p251 = scmp.ne.s32.totalorder %s240, %s241
    %p252 = scmp.eq.s32.totalorder %s20, 0
    %p253 = por %p251, %p252
    %p254 = scmp.ne.s32.totalorder %s240, %s241
    %p255 = scmp.eq.s32.totalorder %s21, 3
    %p256 = por %p254, %p255
    %p258 = scmp.ne.s32.totalorder %s241, %s257
    %p259 = scmp.eq.s32.totalorder %s21, 0
    %p260 = por %p258, %p259
    %s261 = ssub.s32 %s22, %s34
    %s262 = ssub.s32 %s23, %s30
    %s263 = sor.u32 %s261, %s262
    %p264 = scmp.eq.s32.totalorder %s263, 0
    %s266 = sadd.s32 %s265, 1
    %s267 = scalar_select %p264, %s265, %s266
    %p270 = pneg %p264
    %p271 = scmp.eq.s32.totalorder %s15, 3
    %p272 = por %p270, %p271
    %p273 = scmp.ne.s32.totalorder %s265, %s268
    %p274 = scmp.eq.s32.totalorder %s15, 0
    %p275 = por %p273, %p274
    %p276 = scmp.ne.s32.totalorder %s265, %s268
    %p277 = scmp.eq.s32.totalorder %s20, 3
    %p278 = por %p276, %p277
    %p279 = scmp.ne.s32.totalorder %s268, %s269
    %p280 = scmp.eq.s32.totalorder %s20, 0
    %p281 = por %p279, %p280
    %p282 = scmp.ne.s32.totalorder %s268, %s269
    %p283 = scmp.eq.s32.totalorder %s21, 3
    %p284 = por %p282, %p283
    %p286 = scmp.ne.s32.totalorder %s269, %s285
    %p287 = scmp.eq.s32.totalorder %s21, 0
    %p288 = por %p286, %p287
    %p289 = scmp.le.s32.totalorder 1, %s15
    %p290 = scmp.lt.s32.totalorder %s15, 5
    %p291 = pnand %p289, %p290
    %p292 = pneg %p291
    // Predicated region
    $region9: #{encoder_forward.2} parent=5 // pred_check
      _
    $region10: #{encoder_forward.2} parent=5 // pred_check_branch
      %294 = sbr.rel (%p291) target = $region12
    $region11: #{encoder_forward.2} parent=5 // pred_region
      %s295 = ssub.s32 %s15, 1
      // Predicated region
      $region13: #{encoder_forward.2} parent=11 // pred_check
        %p296 = pneg %p148
      $region14: #{encoder_forward.2} parent=11 // pred_check_branch
        %298 = sbr.rel (%p296) target = $region16
      $region15: #{encoder_forward.2} parent=11 // pred_region
        _
      $region16: #{encoder_forward.2} parent=11 // pred_fallthru
        _
      // Predicated region
      $region17: #{encoder_forward.2} parent=11 // pred_check
        %p299 = pneg %p169
      $region18: #{encoder_forward.2} parent=11 // pred_check_branch
        %301 = sbr.rel (%p299) target = $region20
      $region19: #{encoder_forward.2} parent=11 // pred_region
        _
      $region20: #{encoder_forward.2} parent=11 // pred_fallthru
        _
    $region12: #{encoder_forward.2} parent=5 // pred_fallthru
      _
    %p302 = scmp.lt.s32.totalorder %s15, 4
    // Predicated region
    $region21: #{encoder_forward.2} parent=5 // pred_check
      %p303 = pneg %p302
    $region22: #{encoder_forward.2} parent=5 // pred_check_branch
      %305 = sbr.rel (%p303) target = $region24
    $region23: #{encoder_forward.2} parent=5 // pred_region
      // Predicated region
      $region25: #{encoder_forward.2} parent=23 // pred_check
        %p306 = pneg %p49
      $region26: #{encoder_forward.2} parent=23 // pred_check_branch
        %308 = sbr.rel (%p306) target = $region28
      $region27: #{encoder_forward.2} parent=23 // pred_region
        %s309 = smul.u32 4, %s23
        %p310 = scmp.lt.s32.totalorder %s22, 1
        %s311 = scalar_select %p310, %s22, 1
        %p312 = scmp.lt.s32.totalorder %s309, 7
        %s313 = scalar_select %p312, %s309, 7
        %s314 = smul.addr %s311, 8
        %s315 = sadd.s32 %s313, %s314
        %s316 = smul.addr %s315, 4
        %s317 = scalar_lea.vmem %s0, %s316
        %s318 = smul.u32 4, %s23
      $region28: #{encoder_forward.2} parent=23 // pred_fallthru
        _
      // Predicated region
      $region29: #{encoder_forward.2} parent=23 // pred_check
        %p319 = pneg %p85
      $region30: #{encoder_forward.2} parent=23 // pred_check_branch
        %321 = sbr.rel (%p319) target = $region32
      $region31: #{encoder_forward.2} parent=23 // pred_region
        %s322 = smul.u32 %s23, 4
        %s323 = ssub.s32 %s322, 1
        %p324 = scmp.gt.s32.totalorder %s323, 0
        %s325 = scalar_select %p324, %s323, 0
        %p326 = scmp.lt.s32.totalorder %s22, 1
        %s327 = scalar_select %p326, %s22, 1
        %p328 = scmp.lt.s32.totalorder %s325, 7
        %s329 = scalar_select %p328, %s325, 7
        %s330 = smul.addr %s327, 8
        %s331 = sadd.s32 %s329, %s330
        %s332 = smul.addr %s331, 4
        %s333 = scalar_lea.vmem %s1, %s332
        %s334 = smul.u32 %s23, 4
        %s335 = ssub.s32 %s334, 1
        %p336 = scmp.gt.s32.totalorder %s335, 0
        %s337 = scalar_select %p336, %s335, 0
      $region32: #{encoder_forward.2} parent=23 // pred_fallthru
        _
      // Predicated region
      $region33: #{encoder_forward.2} parent=23 // pred_check
        %p338 = pneg %p121
      $region34: #{encoder_forward.2} parent=23 // pred_check_branch
        %340 = sbr.rel (%p338) target = $region36
      $region35: #{encoder_forward.2} parent=23 // pred_region
        %s341 = smul.u32 %s23, 4
        %s342 = sadd.s32 %s341, 4
        %p343 = scmp.lt.s32.totalorder %s342, 7
        %s344 = scalar_select %p343, %s342, 7
        %p345 = scmp.lt.s32.totalorder %s22, 1
        %s346 = scalar_select %p345, %s22, 1
        %p347 = scmp.lt.s32.totalorder %s344, 7
        %s348 = scalar_select %p347, %s344, 7
        %s349 = smul.addr %s346, 8
        %s350 = sadd.s32 %s348, %s349
        %s351 = smul.addr %s350, 4
        %s352 = scalar_lea.vmem %s2, %s351
        %s353 = smul.u32 %s23, 4
        %s354 = sadd.s32 %s353, 4
        %p355 = scmp.lt.s32.totalorder %s354, 7
        %s356 = scalar_select %p355, %s354, 7
      $region36: #{encoder_forward.2} parent=23 // pred_fallthru
        _
    $region24: #{encoder_forward.2} parent=5 // pred_fallthru
      _
    %p357 = scmp.le.s32.totalorder 1, %s15
    %p358 = scmp.lt.s32.totalorder %s15, 5
    %p359 = pnand %p357, %p358
    %p360 = pneg %p359
    // Predicated region
    $region37: #{encoder_forward.2} parent=5 // pred_check
      _
    $region38: #{encoder_forward.2} parent=5 // pred_check_branch
      %362 = sbr.rel (%p359) target = $region40
    $region39: #{encoder_forward.2} parent=5 // pred_region
      %s363 = ssub.s32 %s15, 1
      %s364 = smul.u32 4, %s25
      %p365 = scmp.lt.s32.totalorder %s24, 1
      %s366 = scalar_select %p365, %s24, 1
      %p367 = scmp.lt.s32.totalorder %s364, 7
      %s368 = scalar_select %p367, %s364, 7
      %s369 = smul.addr %s366, 8
      %s370 = sadd.s32 %s368, %s369
      %s371 = smul.addr %s370, 4
      %s372 = scalar_lea.vmem %s0, %s371
      %p373 = pneg %p55
      %p374 = pneg %p52
      %s375 = smul.u32 %s25, 4
      %s376 = ssub.s32 %s375, 1
      %p377 = scmp.gt.s32.totalorder %s376, 0
      %s378 = scalar_select %p377, %s376, 0
      %p379 = scmp.lt.s32.totalorder %s24, 1
      %s380 = scalar_select %p379, %s24, 1
      %p381 = scmp.lt.s32.totalorder %s378, 7
      %s382 = scalar_select %p381, %s378, 7
      %s383 = smul.addr %s380, 8
      %s384 = sadd.s32 %s382, %s383
      %s385 = smul.addr %s384, 4
      %s386 = scalar_lea.vmem %s1, %s385
      %p387 = pneg %p91
      %p388 = pneg %p88
      %s389 = smul.u32 %s25, 4
      %s390 = sadd.s32 %s389, 4
      %p391 = scmp.lt.s32.totalorder %s390, 7
      %s392 = scalar_select %p391, %s390, 7
      %p393 = scmp.lt.s32.totalorder %s24, 1
      %s394 = scalar_select %p393, %s24, 1
      %p395 = scmp.lt.s32.totalorder %s392, 7
      %s396 = scalar_select %p395, %s392, 7
      %s397 = smul.addr %s394, 8
      %s398 = sadd.s32 %s396, %s397
      %s399 = smul.addr %s398, 4
      %s400 = scalar_lea.vmem %s2, %s399
      %p401 = pneg %p127
      %p402 = pneg %p124
      %p403 = pneg %p148
      %p404 = pneg %p145
      %p405 = pneg %p169
      %p406 = pneg %p166
      %p407 = pneg %p197
      %p408 = pneg %p194
      %s409 = smul.u32 4, %s25
      %p410 = scmp.lt.s32.totalorder %s24, 1
      %s411 = scalar_select %p410, %s24, 1
      %p412 = scmp.lt.s32.totalorder %s409, 7
      %s413 = scalar_select %p412, %s409, 7
      %s414 = smul.addr %s411, 8
      %s415 = sadd.s32 %s413, %s414
      %s416 = smul.addr %s415, 4
      %s417 = scalar_lea.vmem %s5, %s416
      %p418 = pneg %p225
      %p419 = pneg %p222
      %s420 = smul.u32 4, %s25
      %p421 = scmp.lt.s32.totalorder %s24, 1
      %s422 = scalar_select %p421, %s24, 1
      %p423 = scmp.lt.s32.totalorder %s420, 7
      %s424 = scalar_select %p423, %s420, 7
      %s425 = smul.addr %s422, 8
      %s426 = sadd.s32 %s424, %s425
      %s427 = smul.addr %s426, 4
      %s428 = scalar_lea.vmem %s6, %s427
      %p429 = pneg %p253
      %p430 = pneg %p250
      %p431 = scmp.lt.s32.totalorder %s24, 1
      %s432 = scalar_select %p431, %s24, 1
      %p433 = scmp.lt.s32.totalorder %s25, 1
      %s434 = scalar_select %p433, %s25, 1
      %s435 = smul.addr %s432, 2
      %s436 = sadd.s32 %s434, %s435
      %s437 = scalar_lea.vmem %s7, %s436
      %p438 = pneg %p281
      %p439 = pneg %p278
      %p440 = scmp.lt.s32.totalorder %s24, 1
      %s441 = scalar_select %p440, %s24, 1
      %p442 = scmp.lt.s32.totalorder %s25, 1
      %s443 = scalar_select %p442, %s25, 1
      %s444 = smul.addr %s441, 2
      %s445 = sadd.s32 %s443, %s444
      %s446 = scalar_lea.vmem %s8, %s445
      %s447 = smul.u32 4, %s25
      %p448 = scmp.lt.s32.totalorder %s24, 1
      %s449 = scalar_select %p448, %s24, 1
      %p450 = scmp.lt.s32.totalorder %s447, 7
      %s451 = scalar_select %p450, %s447, 7
      %s452 = smul.addr %s449, 8
      %s453 = sadd.s32 %s451, %s452
      %s454 = smul.addr %s453, 4
      %s455 = scalar_lea.vmem %s0, %s454
      %s456 = smul.u32 4, %s25
      %s457 = smul.u32 %s25, 4
      %s458 = ssub.s32 %s457, 1
      %p459 = scmp.gt.s32.totalorder %s458, 0
      %s460 = scalar_select %p459, %s458, 0
      %p461 = scmp.lt.s32.totalorder %s24, 1
      %s462 = scalar_select %p461, %s24, 1
      %p463 = scmp.lt.s32.totalorder %s460, 7
      %s464 = scalar_select %p463, %s460, 7
      %s465 = smul.addr %s462, 8
      %s466 = sadd.s32 %s464, %s465
      %s467 = smul.addr %s466, 4
      %s468 = scalar_lea.vmem %s1, %s467
      %s469 = smul.u32 %s25, 4
      %s470 = ssub.s32 %s469, 1
      %p471 = scmp.gt.s32.totalorder %s470, 0
      %s472 = scalar_select %p471, %s470, 0
      %s473 = smul.u32 %s25, 4
      %s474 = sadd.s32 %s473, 4
      %p475 = scmp.lt.s32.totalorder %s474, 7
      %s476 = scalar_select %p475, %s474, 7
      %p477 = scmp.lt.s32.totalorder %s24, 1
      %s478 = scalar_select %p477, %s24, 1
      %p479 = scmp.lt.s32.totalorder %s476, 7
      %s480 = scalar_select %p479, %s476, 7
      %s481 = smul.addr %s478, 8
      %s482 = sadd.s32 %s480, %s481
      %s483 = smul.addr %s482, 4
      %s484 = scalar_lea.vmem %s2, %s483
      %s485 = smul.u32 %s25, 4
      %s486 = sadd.s32 %s485, 4
      %p487 = scmp.lt.s32.totalorder %s486, 7
      %s488 = scalar_select %p487, %s486, 7
      %s489 = smul.u32 4, %s25
      %p490 = scmp.lt.s32.totalorder %s24, 1
      %s491 = scalar_select %p490, %s24, 1
      %p492 = scmp.lt.s32.totalorder %s489, 7
      %s493 = scalar_select %p492, %s489, 7
      %s494 = smul.addr %s491, 8
      %s495 = sadd.s32 %s493, %s494
      %s496 = smul.addr %s495, 4
      %s497 = scalar_lea.vmem %s5, %s496
      %s498 = smul.u32 4, %s25
      %s499 = smul.u32 4, %s25
      %p500 = scmp.lt.s32.totalorder %s24, 1
      %s501 = scalar_select %p500, %s24, 1
      %p502 = scmp.lt.s32.totalorder %s499, 7
      %s503 = scalar_select %p502, %s499, 7
      %s504 = smul.addr %s501, 8
      %s505 = sadd.s32 %s503, %s504
      %s506 = smul.addr %s505, 4
      %s507 = scalar_lea.vmem %s6, %s506
      %s508 = smul.u32 4, %s25
      %p509 = scmp.lt.s32.totalorder %s24, 1
      %s510 = scalar_select %p509, %s24, 1
      %p511 = scmp.lt.s32.totalorder %s25, 1
      %s512 = scalar_select %p511, %s25, 1
      %s513 = smul.addr %s510, 2
      %s514 = sadd.s32 %s512, %s513
      %s515 = scalar_lea.vmem %s7, %s514
      %p516 = scmp.lt.s32.totalorder %s24, 1
      %s517 = scalar_select %p516, %s24, 1
      %p518 = scmp.lt.s32.totalorder %s25, 1
      %s519 = scalar_select %p518, %s25, 1
      %s520 = smul.addr %s517, 2
      %s521 = sadd.s32 %s519, %s520
      %s522 = scalar_lea.vmem %s8, %s521
      %v524 = vld [vmem:[%s455] sm:$0xf]
      %v525 = vld [vmem:[%s455 + $0x4] sm:$0xf]
      %v526 = vld [vmem:[%s455 + $0x8] sm:$0xf]
      %v527 = vld [vmem:[%s455 + $0xc] sm:$0xf]
      %v528 = vunpack.c.l.bf16 %v524
      %v529 = vunpack.c.l.bf16 %v525
      %v530 = vunpack.c.l.bf16 %v526
      %v531 = vunpack.c.l.bf16 %v527
      %v532 = vld [vmem:[%s468] sm:$0xf]
      %v533 = vunpack.c.l.bf16 %v532
      %v534 = vld [vmem:[%s484] sm:$0xf]
      %v535 = vunpack.c.l.bf16 %v534
      %p536 = scmp.eq.s32.totalorder %s25, 0
      %s537 = scalar_select %p536, 1, 0
      %v538 = vstv %s537
      %vm539 = vcmp.eq.s32.totalorder %v538, 1
      %v540 = vsel %vm539, 0.0, %v533
      %p541 = scmp.eq.s32.totalorder %s25, 1
      %s542 = scalar_select %p541, 1, 0
      %v543 = vstv %s542
      %vm544 = vcmp.eq.s32.totalorder %v543, 1
      %v545 = vsel %vm544, 0.0, %v535
      %v546 = vld [vmem:[%s3] sm:$0x1]
      %v547 = vld [vmem:[%s3 + $0x1] sm:$0x1]
      %v548 = vld [vmem:[%s3 + $0x2] sm:$0x1]
      %v549 = vld [vmem:[%s3 + $0x3] sm:$0x1]
      %v551 = vlaneseq
      %v552 = vshrl.u32 %v551, 7
      %v553 = vsub.s32 0, %v552
      %v554 = vrot.slane %v546, %v553
      %v556 = vmul.f32 %v540, %v554
      %v557 = vmul.f32 %v528, %v554
      %v558 = vmul.f32 %v529, %v554
      %v559 = vmul.f32 %v530, %v554
      %v560 = vmul.f32 %v531, %v554
      %v561 = vmul.f32 %v545, %v554
      %v563 = vlaneseq
      %v564 = vshrl.u32 %v563, 7
      %v565 = vsub.s32 0, %v564
      %v566 = vrot.slane %v547, %v565
      %567 = vrot.lane.b32.xlu0 %v566, 4
      %v568 = vpop.permute.xlu0 %567
      %v570 = vmul.f32 %v540, %v568
      %v571 = vmul.f32 %v528, %v568
      %v572 = vmul.f32 %v529, %v568
      %v573 = vmul.f32 %v530, %v568
      %v574 = vmul.f32 %v531, %v568
      %v575 = vmul.f32 %v545, %v568
      %582 = vrot.lane.b32.xlu0 %v570, 124
      %v583 = vpop.permute.xlu0 %582
      %584 = vrot.lane.b32.xlu0 %v571, 124
      %v585 = vpop.permute.xlu0 %584
      %586 = vrot.lane.b32.xlu0 %v572, 124
      %v587 = vpop.permute.xlu0 %586
      %588 = vrot.lane.b32.xlu0 %v573, 124
      %v589 = vpop.permute.xlu0 %588
      %590 = vrot.lane.b32.xlu0 %v574, 124
      %v591 = vpop.permute.xlu0 %590
      %592 = vrot.lane.b32.xlu0 %v575, 124
      %v593 = vpop.permute.xlu0 %592
      %v600 = vadd.f32 %v556, %v583
      %v601 = vadd.f32 %v557, %v585
      %v602 = vadd.f32 %v558, %v587
      %v603 = vadd.f32 %v559, %v589
      %v604 = vadd.f32 %v560, %v591
      %v605 = vadd.f32 %v561, %v593
      %v607 = vlaneseq
      %v608 = vshrl.u32 %v607, 7
      %v609 = vsub.s32 0, %v608
      %v610 = vrot.slane %v548, %v609
      %611 = vrot.lane.b32.xlu0 %v610, 8
      %v612 = vpop.permute.xlu0 %611
      %v614 = vmul.f32 %v540, %v612
      %v615 = vmul.f32 %v528, %v612
      %v616 = vmul.f32 %v529, %v612
      %v617 = vmul.f32 %v530, %v612
      %v618 = vmul.f32 %v531, %v612
      %v619 = vmul.f32 %v545, %v612
      %626 = vrot.lane.b32.xlu0 %v614, 120
      %v627 = vpop.permute.xlu0 %626
      %628 = vrot.lane.b32.xlu0 %v615, 120
      %v629 = vpop.permute.xlu0 %628
      %630 = vrot.lane.b32.xlu0 %v616, 120
      %v631 = vpop.permute.xlu0 %630
      %632 = vrot.lane.b32.xlu0 %v617, 120
      %v633 = vpop.permute.xlu0 %632
      %634 = vrot.lane.b32.xlu0 %v618, 120
      %v635 = vpop.permute.xlu0 %634
      %636 = vrot.lane.b32.xlu0 %v619, 120
      %v637 = vpop.permute.xlu0 %636
      %v644 = vadd.f32 %v600, %v627
      %v645 = vadd.f32 %v601, %v629
      %v646 = vadd.f32 %v602, %v631
      %v647 = vadd.f32 %v603, %v633
      %v648 = vadd.f32 %v604, %v635
      %v649 = vadd.f32 %v605, %v637
      %v651 = vlaneseq
      %v652 = vshrl.u32 %v651, 7
      %v653 = vsub.s32 0, %v652
      %v654 = vrot.slane %v549, %v653
      %655 = vrot.lane.b32.xlu0 %v654, 12
      %v656 = vpop.permute.xlu0 %655
      %v658 = vmul.f32 %v540, %v656
      %v659 = vmul.f32 %v528, %v656
      %v660 = vmul.f32 %v529, %v656
      %v661 = vmul.f32 %v530, %v656
      %v662 = vmul.f32 %v531, %v656
      %v663 = vmul.f32 %v545, %v656
      %670 = vrot.lane.b32.xlu0 %v658, 116
      %v671 = vpop.permute.xlu0 %670
      %672 = vrot.lane.b32.xlu0 %v659, 116
      %v673 = vpop.permute.xlu0 %672
      %674 = vrot.lane.b32.xlu0 %v660, 116
      %v675 = vpop.permute.xlu0 %674
      %676 = vrot.lane.b32.xlu0 %v661, 116
      %v677 = vpop.permute.xlu0 %676
      %678 = vrot.lane.b32.xlu0 %v662, 116
      %v679 = vpop.permute.xlu0 %678
      %680 = vrot.lane.b32.xlu0 %v663, 116
      %v681 = vpop.permute.xlu0 %680
      %v688 = vadd.f32 %v644, %v671
      %v689 = vadd.f32 %v645, %v673
      %v690 = vadd.f32 %v646, %v675
      %v691 = vadd.f32 %v647, %v677
      %v692 = vadd.f32 %v648, %v679
      %v693 = vadd.f32 %v649, %v681
      %v694 = vpack.c.bf16 %v689, %v689
      %v695 = vpack.c.bf16 %v690, %v690
      %v696 = vpack.c.bf16 %v691, %v691
      %v697 = vpack.c.bf16 %v692, %v692
      %vm698 = vcmask 27648
      %699 = vst.msk [vmem:[%s497] sm:$0xf] %vm698, %v694
      %700 = vst.msk [vmem:[%s497 + $0x4] sm:$0xf] %vm698, %v695
      %701 = vst.msk [vmem:[%s497 + $0x8] sm:$0xf] %vm698, %v696
      %702 = vst.msk [vmem:[%s497 + $0xc] sm:$0xf] %vm698, %v697
      %v703 = vpack.c.bf16 %v688, %v688
      %v704 = vpack.c.bf16 %v693, %v693
      %v706 = vshrl.u32 %v703, 16
      %v708 = vrot.slane %v706, 7
      %v709 = vshll.u32 %v703, 16
      %v711 = vor.u32 %v708, %v709
      %v713 = vshrl.u32 %v694, 16
      %v715 = vrot.slane %v713, 7
      %v716 = vshll.u32 %v694, 16
      %v718 = vor.u32 %v715, %v716
      %v720 = vshrl.u32 %v695, 16
      %v722 = vrot.slane %v720, 7
      %v723 = vshll.u32 %v695, 16
      %v725 = vor.u32 %v722, %v723
      %v727 = vshrl.u32 %v696, 16
      %v729 = vrot.slane %v727, 7
      %v730 = vshll.u32 %v696, 16
      %v732 = vor.u32 %v729, %v730
      %v734 = vshrl.u32 %v697, 16
      %v736 = vrot.slane %v734, 7
      %v737 = vshll.u32 %v697, 16
      %v739 = vor.u32 %v736, %v737
      %v741 = vshrl.u32 %v704, 16
      %v743 = vrot.slane %v741, 7
      %v744 = vshll.u32 %v704, 16
      %v746 = vor.u32 %v743, %v744
      %vm753 = vcmask 1040384
      %vm754 = vsmask.f32 256
      %vm755 = vmand %vm753, %vm754
      %v756 = vsel %vm755, 0, %v711
      %v757 = vsel %vm755, 0, %v718
      %v758 = vsel %vm755, 0, %v725
      %v759 = vsel %vm755, 0, %v732
      %v760 = vsel %vm755, 0, %v739
      %v761 = vsel %vm755, 0, %v746
      %v762 = vrot.slane %v709, 1
      %v763 = vor.u32 %v706, %v762
      %v764 = vrot.slane %v716, 1
      %v765 = vor.u32 %v713, %v764
      %v766 = vrot.slane %v723, 1
      %v767 = vor.u32 %v720, %v766
      %v768 = vrot.slane %v730, 1
      %v769 = vor.u32 %v727, %v768
      %v770 = vrot.slane %v737, 1
      %v771 = vor.u32 %v734, %v770
      %v772 = vrot.slane %v744, 1
      %v773 = vor.u32 %v741, %v772
      %vm780 = vcmask 1043456
      %vm781 = vsmask.f32 3328
      %vm782 = vmand %vm780, %vm781
      %v783 = vsel %vm782, %v763, 0
      %v784 = vsel %vm782, %v765, 0
      %v785 = vsel %vm782, %v767, 0
      %v786 = vsel %vm782, %v769, 0
      %v787 = vsel %vm782, %v771, 0
      %v788 = vsel %vm782, %v773, 0
      %795 = vrot.lane.b32.xlu0 %v703, 4
      %v796 = vpop.permute.xlu0 %795
      %797 = vrot.lane.b32.xlu0 %v694, 4
      %v798 = vpop.permute.xlu0 %797
      %799 = vrot.lane.b32.xlu0 %v695, 4
      %v800 = vpop.permute.xlu0 %799
      %801 = vrot.lane.b32.xlu0 %v696, 4
      %v802 = vpop.permute.xlu0 %801
      %803 = vrot.lane.b32.xlu0 %v697, 4
      %v804 = vpop.permute.xlu0 %803
      %805 = vrot.lane.b32.xlu0 %v704, 4
      %v806 = vpop.permute.xlu0 %805
      %813 = vrot.lane.b32.xlu0 %v783, 8
      %v814 = vpop.permute.xlu0 %813
      %815 = vrot.lane.b32.xlu0 %v784, 8
      %v816 = vpop.permute.xlu0 %815
      %817 = vrot.lane.b32.xlu0 %v785, 8
      %v818 = vpop.permute.xlu0 %817
      %819 = vrot.lane.b32.xlu0 %v786, 8
      %v820 = vpop.permute.xlu0 %819
      %821 = vrot.lane.b32.xlu0 %v787, 8
      %v822 = vpop.permute.xlu0 %821
      %823 = vrot.lane.b32.xlu0 %v788, 8
      %v824 = vpop.permute.xlu0 %823
      %vm825 = vcmask 31744
      %v828 = vsel %vm825, %v756, %v796
      %v831 = vsel %vm825, %v757, %v798
      %v834 = vsel %vm825, %v758, %v800
      %v837 = vsel %vm825, %v759, %v802
      %v840 = vsel %vm825, %v760, %v804
      %v843 = vsel %vm825, %v761, %v806
      %vm844 = vcmask 64512
      %v846 = vsel %vm844, %v828, %v814
      %v848 = vsel %vm844, %v831, %v816
      %v850 = vsel %vm844, %v834, %v818
      %v852 = vsel %vm844, %v837, %v820
      %v854 = vsel %vm844, %v840, %v822
      %v856 = vsel %vm844, %v843, %v824
      %861 = vrot.lane.b32.xlu0 %v848, 12
      %v862 = vpop.permute.xlu0 %861
      %863 = vrot.lane.b32.xlu0 %v850, 12
      %v864 = vpop.permute.xlu0 %863
      %865 = vrot.lane.b32.xlu0 %v852, 12
      %v866 = vpop.permute.xlu0 %865
      %867 = vrot.lane.b32.xlu0 %v854, 12
      %v868 = vpop.permute.xlu0 %867
      %870 = vrot.lane.b32.xlu0 %v850, 24
      %v871 = vpop.permute.xlu0 %870
      %872 = vrot.lane.b32.xlu0 %v852, 24
      %v873 = vpop.permute.xlu0 %872
      %874 = vrot.lane.b32.xlu0 %v854, 24
      %v875 = vpop.permute.xlu0 %874
      %876 = vrot.lane.b32.xlu0 %v856, 24
      %v877 = vpop.permute.xlu0 %876
      %vm878 = vcmask 97280
      %v880 = vsel %vm878, %v846, %v862
      %v882 = vsel %vm878, %v848, %v864
      %v884 = vsel %vm878, %v850, %v866
      %v886 = vsel %vm878, %v852, %v868
      %vm887 = vcmask 195584
      %v889 = vsel %vm887, %v880, %v871
      %v891 = vsel %vm887, %v882, %v873
      %v893 = vsel %vm887, %v884, %v875
      %v895 = vsel %vm887, %v886, %v877
      %v896 = vld [vmem:[%s4] sm:$0xf]
      %v897 = vld [vmem:[%s4 + $0x4] sm:$0xf]
      %v898 = vld [vmem:[%s4 + $0x8] sm:$0xf]
      %v899 = vld [vmem:[%s4 + $0xc] sm:$0xf]
      %v900 = vld [vmem:[%s4 + $0x10] sm:$0x3]
      %v905 = vunpack.c.l.b16 %v889
      %v906 = vunpack.c.l.b16 %v891
      %v907 = vunpack.c.l.b16 %v893
      %v908 = vunpack.c.l.b16 %v895
      %v909 = vpack.c.b16 %v906, %v905
      %v910 = vpack.c.b16 %v908, %v907
      %v916 = vunpack.c.l.b16 %v896
      %v917 = vunpack.c.l.b16 %v897
      %v918 = vunpack.c.l.b16 %v898
      %v919 = vunpack.c.l.b16 %v899
      %v920 = vunpack.c.l.b16 %v900
      %v921 = vpack.c.b16 %v917, %v916
      %v922 = vpack.c.b16 %v919, %v918
      %v923 = vpack.c.b16 %v920, %v920
      %vm926 = vcmask 293888
      %v928 = vsel %vm926, %v909, 0
      %v931 = vsel %vm926, %v910, 0
      %vm933 = vcmask 1041408
      %v935 = vsel %vm933, %v923, 0
      %937 = vmatprep.subr.bf16.mxu0 0
      %938 = vmatpush1.bf16.msra.mxu0 0
      %939 = vmatprep.subr.bf16.mxu0 0
      %940 = vmatpush1.bf16.msra.mxu0 0
      %941 = vmatprep.subr.bf16.mxu0 0
      %942 = vmatpush1.bf16.msra.mxu0 0
      %943 = vmatprep.subr.bf16.mxu0 0
      %944 = vmatpush1.bf16.msra.mxu0 0
      %945 = vmatprep.subr.bf16.mxu0 0
      %946 = vmatpush1.bf16.msra.mxu0 0
      %947 = vmatprep.subr.bf16.mxu0 0
      %948 = vmatpush1.bf16.msra.mxu0 %v935
      %949 = vmatprep.subr.bf16.mxu0 0
      %950 = vmatpush1.bf16.msra.mxu0 %v922
      %951 = vmatprep.subr.bf16.mxu0 0
      %952 = vmatpush1.bf16.msra.mxu0 %v921
      %953 = vmatprep.subr.bf16.mxu0 0
      %954 = vmatpush2.bf16.msra.mxu0 0
      %955 = vmatprep.subr.bf16.mxu0 0
      %956 = vmatpush2.bf16.msra.mxu0 0
      %957 = vmatprep.subr.bf16.mxu0 0
      %958 = vmatpush2.bf16.msra.mxu0 0
      %959 = vmatprep.subr.bf16.mxu0 0
      %960 = vmatpush2.bf16.msra.mxu0 0
      %961 = vmatprep.subr.bf16.mxu0 0
      %962 = vmatpush2.bf16.msra.mxu0 0
      %963 = vmatprep.subr.bf16.mxu0 0
      %964 = vmatpush2.bf16.msra.mxu0 0
      %965 = vmatprep.subr.bf16.mxu0 0
      %966 = vmatpush2.bf16.msra.mxu0 0
      %967 = vmatprep.subr.bf16.mxu0 0
      %968 = vmatpush2.bf16.msra.mxu0 0
      %969 = vmatprep.mubr.bf16.mxu0 0
      %970 = vmatmul.mubr.bf16.gmra.mxu0 %v928
      %v971 = vpop.f32.mrf.mxu0
      %v972 = vadd.f32 0.0, %v971
      %v973 = vpop.f32.mrf.mxu0
      %v974 = vpop.f32.mrf.mxu0
      %v975 = vadd.f32 0.0, %v974
      %v976 = vpop.f32.mrf.mxu0
      %977 = vmatprep.mubr.bf16.mxu0 0
      %978 = vmatmul.mubr.bf16.gmra.mxu0 %v931
      %v979 = vpop.f32.mrf.mxu0
      %v980 = vadd.f32 0.0, %v979
      %v981 = vpop.f32.mrf.mxu0
      %v982 = vpop.f32.mrf.mxu0
      %v983 = vadd.f32 0.0, %v982
      %v984 = vpop.f32.mrf.mxu0
      %985 = vdwg.mxu0
      %v986 = vmax.f32 %v972, 0.0
      %v987 = vmax.f32 %v975, 0.0
      %v988 = vmax.f32 %v980, 0.0
      %v989 = vmax.f32 %v983, 0.0
      %v990 = vpack.c.bf16 %v986, %v986
      %v991 = vpack.c.bf16 %v987, %v987
      %v992 = vpack.c.bf16 %v988, %v988
      %v993 = vpack.c.bf16 %v989, %v989
      %vm994 = vcmask 60416
      %995 = vst.msk [vmem:[%s507] sm:$0xf] %vm994, %v990
      %996 = vst.msk [vmem:[%s507 + $0x4] sm:$0xf] %vm994, %v991
      %997 = vst.msk [vmem:[%s507 + $0x8] sm:$0xf] %vm994, %v992
      %998 = vst.msk [vmem:[%s507 + $0xc] sm:$0xf] %vm994, %v993
      %v999 = vsel %vm844, %v986, 0.0
      %v1000 = vsel %vm844, %v987, 0.0
      %v1001 = vadd.f32 %v999, %v1000
      %v1002 = vsel %vm844, %v988, 0.0
      %v1003 = vadd.f32 %v1001, %v1002
      %v1004 = vsel %vm844, %v989, 0.0
      %v1005 = vadd.f32 %v1003, %v1004
      %v1006 = vrot.slane %v1005, 4
      %v1007 = vadd.f32 %v1005, %v1006
      %v1008 = vrot.slane %v1007, 2
      %v1009 = vadd.f32 %v1007, %v1008
      %v1010 = vrot.slane %v1009, 1
      %v1011 = vadd.f32 %v1009, %v1010
      %vm1012 = vcmask 57344
      %1013 = vst.msk [vmem:[%s515] sm:$0x1] %vm1012, %v1011
      %v1014 = vmul.f32 %v986, %v986
      %v1015 = vmul.f32 %v987, %v987
      %v1016 = vmul.f32 %v988, %v988
      %v1017 = vmul.f32 %v989, %v989
      %v1018 = vsel %vm844, %v1014, 0.0
      %v1019 = vsel %vm844, %v1015, 0.0
      %v1020 = vadd.f32 %v1018, %v1019
      %v1021 = vsel %vm844, %v1016, 0.0
      %v1022 = vadd.f32 %v1020, %v1021
      %v1023 = vsel %vm844, %v1017, 0.0
      %v1024 = vadd.f32 %v1022, %v1023
      %v1025 = vrot.slane %v1024, 4
      %v1026 = vadd.f32 %v1024, %v1025
      %v1027 = vrot.slane %v1026, 2
      %v1028 = vadd.f32 %v1026, %v1027
      %v1029 = vrot.slane %v1028, 1
      %v1030 = vadd.f32 %v1028, %v1029
      %1031 = vst.msk [vmem:[%s522] sm:$0x1] %vm1012, %v1030
      %s1032 = smul.u32 4, %s25
      %p1033 = scmp.lt.s32.totalorder %s24, 1
      %s1034 = scalar_select %p1033, %s24, 1
      %p1035 = scmp.lt.s32.totalorder %s1032, 7
      %s1036 = scalar_select %p1035, %s1032, 7
      %s1037 = smul.addr %s1034, 8
      %s1038 = sadd.s32 %s1036, %s1037
      %s1039 = smul.addr %s1038, 4
      %s1040 = scalar_lea.vmem %s5, %s1039
      %s1041 = smul.u32 4, %s25
      %p1042 = scmp.lt.s32.totalorder %s24, 1
      %s1043 = scalar_select %p1042, %s24, 1
      %p1044 = scmp.lt.s32.totalorder %s1041, 7
      %s1045 = scalar_select %p1044, %s1041, 7
      %s1046 = smul.addr %s1043, 8
      %s1047 = sadd.s32 %s1045, %s1046
      %s1048 = smul.addr %s1047, 4
      %s1049 = scalar_lea.vmem %s6, %s1048
      %p1050 = scmp.lt.s32.totalorder %s24, 1
      %s1051 = scalar_select %p1050, %s24, 1
      %p1052 = scmp.lt.s32.totalorder %s25, 1
      %s1053 = scalar_select %p1052, %s25, 1
      %s1054 = smul.addr %s1051, 2
      %s1055 = sadd.s32 %s1053, %s1054
      %s1056 = scalar_lea.vmem %s7, %s1055
      %p1057 = scmp.lt.s32.totalorder %s24, 1
      %s1058 = scalar_select %p1057, %s24, 1
      %p1059 = scmp.lt.s32.totalorder %s25, 1
      %s1060 = scalar_select %p1059, %s25, 1
      %s1061 = smul.addr %s1058, 2
      %s1062 = sadd.s32 %s1060, %s1061
      %s1063 = scalar_lea.vmem %s8, %s1062
      // Predicated region
      $region41: #{encoder_forward.2} parent=39 // pred_check
        %p1064 = pneg %p194
      $region42: #{encoder_forward.2} parent=39 // pred_check_branch
        %1066 = sbr.rel (%p1064) target = $region44
      $region43: #{encoder_forward.2} parent=39 // pred_region
        %s1067 = smul.u32 4, %s25
      $region44: #{encoder_forward.2} parent=39 // pred_fallthru
        _
      // Predicated region
      $region45: #{encoder_forward.2} parent=39 // pred_check
        %p1068 = pneg %p222
      $region46: #{encoder_forward.2} parent=39 // pred_check_branch
        %1070 = sbr.rel (%p1068) target = $region48
      $region47: #{encoder_forward.2} parent=39 // pred_region
        %s1071 = smul.u32 4, %s25
      $region48: #{encoder_forward.2} parent=39 // pred_fallthru
        _
      // Predicated region
      $region49: #{encoder_forward.2} parent=39 // pred_check
        %p1072 = pneg %p250
      $region50: #{encoder_forward.2} parent=39 // pred_check_branch
        %1074 = sbr.rel (%p1072) target = $region52
      $region51: #{encoder_forward.2} parent=39 // pred_region
        _
      $region52: #{encoder_forward.2} parent=39 // pred_fallthru
        _
      // Predicated region
      $region53: #{encoder_forward.2} parent=39 // pred_check
        %p1075 = pneg %p278
      $region54: #{encoder_forward.2} parent=39 // pred_check_branch
        %1077 = sbr.rel (%p1075) target = $region56
      $region55: #{encoder_forward.2} parent=39 // pred_region
        _
      $region56: #{encoder_forward.2} parent=39 // pred_fallthru
        _
    $region40: #{encoder_forward.2} parent=5 // pred_fallthru
      _
    %p1078 = scmp.le.s32.totalorder 2, %s15
    // Predicated region
    $region57: #{encoder_forward.2} parent=5 // pred_check
      %p1079 = pneg %p1078
    $region58: #{encoder_forward.2} parent=5 // pred_check_branch
      %1081 = sbr.rel (%p1079) target = $region60
    $region59: #{encoder_forward.2} parent=5 // pred_region
      %s1082 = ssub.s32 %s15, 2
      // Predicated region
      $region61: #{encoder_forward.2} parent=59 // pred_check
        %p1083 = pneg %p200
      $region62: #{encoder_forward.2} parent=59 // pred_check_branch
        %1085 = sbr.rel (%p1083) target = $region64
      $region63: #{encoder_forward.2} parent=59 // pred_region
        %s1086 = smul.u32 4, %s27
        %p1087 = scmp.lt.s32.totalorder %s26, 1
        %s1088 = scalar_select %p1087, %s26, 1
        %p1089 = scmp.lt.s32.totalorder %s1086, 7
        %s1090 = scalar_select %p1089, %s1086, 7
        %s1091 = smul.addr %s1088, 8
        %s1092 = sadd.s32 %s1090, %s1091
        %s1093 = smul.addr %s1092, 4
        %s1094 = scalar_lea.vmem %s5, %s1093
      $region64: #{encoder_forward.2} parent=59 // pred_fallthru
        _
      // Predicated region
      $region65: #{encoder_forward.2} parent=59 // pred_check
        %p1095 = pneg %p228
      $region66: #{encoder_forward.2} parent=59 // pred_check_branch
        %1097 = sbr.rel (%p1095) target = $region68
      $region67: #{encoder_forward.2} parent=59 // pred_region
        %s1098 = smul.u32 4, %s27
        %p1099 = scmp.lt.s32.totalorder %s26, 1
        %s1100 = scalar_select %p1099, %s26, 1
        %p1101 = scmp.lt.s32.totalorder %s1098, 7
        %s1102 = scalar_select %p1101, %s1098, 7
        %s1103 = smul.addr %s1100, 8
        %s1104 = sadd.s32 %s1102, %s1103
        %s1105 = smul.addr %s1104, 4
        %s1106 = scalar_lea.vmem %s6, %s1105
      $region68: #{encoder_forward.2} parent=59 // pred_fallthru
        _
      // Predicated region
      $region69: #{encoder_forward.2} parent=59 // pred_check
        %p1107 = pneg %p256
      $region70: #{encoder_forward.2} parent=59 // pred_check_branch
        %1109 = sbr.rel (%p1107) target = $region72
      $region71: #{encoder_forward.2} parent=59 // pred_region
        %p1110 = scmp.lt.s32.totalorder %s26, 1
        %s1111 = scalar_select %p1110, %s26, 1
        %p1112 = scmp.lt.s32.totalorder %s27, 1
        %s1113 = scalar_select %p1112, %s27, 1
        %s1114 = smul.addr %s1111, 2
        %s1115 = sadd.s32 %s1113, %s1114
        %s1116 = scalar_lea.vmem %s7, %s1115
      $region72: #{encoder_forward.2} parent=59 // pred_fallthru
        _
      // Predicated region
      $region73: #{encoder_forward.2} parent=59 // pred_check
        %p1117 = pneg %p284
      $region74: #{encoder_forward.2} parent=59 // pred_check_branch
        %1119 = sbr.rel (%p1117) target = $region76
      $region75: #{encoder_forward.2} parent=59 // pred_region
        %p1120 = scmp.lt.s32.totalorder %s26, 1
        %s1121 = scalar_select %p1120, %s26, 1
        %p1122 = scmp.lt.s32.totalorder %s27, 1
        %s1123 = scalar_select %p1122, %s27, 1
        %s1124 = smul.addr %s1121, 2
        %s1125 = sadd.s32 %s1123, %s1124
        %s1126 = scalar_lea.vmem %s8, %s1125
      $region76: #{encoder_forward.2} parent=59 // pred_fallthru
        _
    $region60: #{encoder_forward.2} parent=5 // pred_fallthru
      _
  $region6: #{encoder_forward.2} parent=0 // loop_footer
    %s19 = sadd.s32 1, %s15
  $region7: #{encoder_forward.2} parent=0 // loop_footer_branch
    %14 = sbr.rel target = $region3
  $region8: #{encoder_forward.2} parent=0 // loop_exit
    _

</llo_original>
